<compile_context>
chip_gen: v5e
topology: v5e:2x2
jax: 0.10.0
libtpu: 0.0.40
codegen_flags: <defaults>
</compile_context>

<pallas_src>
import jax
import jax.numpy as jnp
from jax import lax
from jax.experimental import pallas as pl
from jax.experimental.pallas import tpu as pltpu


def _round_up(x, m):
    return ((x + m - 1) // m) * m


def _pick_time_chunk(seq_len, max_chunk=32):
    """Largest chunk <= max_chunk that evenly divides seq_len (avoids seq padding)."""
    for tc in range(min(seq_len, max_chunk), 0, -1):
        if seq_len % tc == 0:
            return tc
    return 1


def _lstm_kernel(gx_ref, wh_ref, h0_ref, c0_ref, y_ref, h_ref, c_ref):
    """One grid step = one chunk of Tc timesteps.

    gx_ref : (Tc, Bp, 4*Hp)  precomputed x @ W_x + b (time-major, padded)
    wh_ref : (Hp, 4*Hp)      recurrent weights, gates stacked [i, f, o, g]
    h0/c0  : (Bp, Hp)        initial state
    y_ref  : (Tc, Bp, Hp)    per-timestep hidden outputs for this chunk
    h_ref, c_ref : (Bp, Hp)  resident carries (constant block index) -> final state
    """
    chunk = pl.program_id(0)
    hp = h_ref.shape[-1]
    tc = gx_ref.shape[0]

    # Initialize the resident carries from the provided initial state once.
    @pl.when(chunk == 0)
    def _():
        h_ref[...] = h0_ref[...]
        c_ref[...] = c0_ref[...]

    wh = wh_ref[...]  # hoisted load; stays in vregs/VMEM across the inner loop

    def step(tt, carry):
        h, c = carry
        # x-projection was hoisted; only the recurrent matmul runs serially.
        gates = gx_ref[tt] + jnp.dot(h, wh, preferred_element_type=jnp.float32)
        # Gate slices start on 128-lane boundaries because hp % 128 == 0.
        i_t = jax.nn.sigmoid(gates[:, 0 * hp:1 * hp])
        f_t = jax.nn.sigmoid(gates[:, 1 * hp:2 * hp])
        o_t = jax.nn.sigmoid(gates[:, 2 * hp:3 * hp])
        g_t = jnp.tanh(gates[:, 3 * hp:4 * hp])
        c_new = f_t * c + i_t * g_t
        h_new = o_t * jnp.tanh(c_new)
        y_ref[tt] = h_new.astype(y_ref.dtype)
        return h_new, c_new

    unroll = True if tc <= 16 else 8
    h_out, c_out = lax.fori_loop(0, tc, step, (h_ref[...], c_ref[...]),
                                 unroll=unroll)
    h_ref[...] = h_out
    c_ref[...] = c_out


def manual_lstm_pallas(x, params, h_0=None, c_0=None, *, max_time_chunk=32):
    """x: (batch, seq, input_dim) float32. Returns (y, (h_T, c_T)) like the PyTorch module."""
    batch, seq_len, input_dim = x.shape
    hidden = params["W_hi"].shape[0]
    dtype = jnp.float32

    bp = _round_up(batch, 8)      # sublane alignment
    hp = _round_up(hidden, 128)   # lane alignment per gate
    tc = _pick_time_chunk(seq_len, max_time_chunk)
    pad_h = hp - hidden

    # Stack gate weights in [i, f, o, g] order, padding each gate to Hp lanes so
    # in-kernel gate slices are lane-aligned. Zero padding keeps the padded
    # hidden/batch entries exactly zero throughout the recurrence.
    def pad_cols(w):
        return jnp.pad(w.astype(dtype), ((0, 0), (0, pad_h)))

    def pad_rows_cols(w):
        return jnp.pad(w.astype(dtype), ((0, pad_h), (0, pad_h)))

    w_x = jnp.concatenate(
        [pad_cols(params[k]) for k in ("W_ii", "W_if", "W_io", "W_ig")], axis=1)       # (in, 4*Hp)
    w_h = jnp.concatenate(
        [pad_rows_cols(params[k]) for k in ("W_hi", "W_hf", "W_ho", "W_hg")], axis=1)  # (Hp, 4*Hp)
    b = jnp.concatenate(
        [jnp.pad(params[k].astype(dtype), (0, pad_h)) for k in ("b_i", "b_f", "b_o", "b_g")])

    # Hoisted input projection: one big parallel matmul over all timesteps,
    # produced directly in time-major layout (seq, batch, 4*Hp).
    gx = jnp.einsum("bsi,ig->sbg", x.astype(dtype), w_x,
                    precision=lax.Precision.HIGHEST) + b
    gx = jnp.pad(gx, ((0, 0), (0, bp - batch), (0, 0)))

    h0 = jnp.zeros((batch, hidden), dtype) if h_0 is None else h_0.astype(dtype)
    c0 = jnp.zeros((batch, hidden), dtype) if c_0 is None else c_0.astype(dtype)
    h0 = jnp.pad(h0, ((0, bp - batch), (0, pad_h)))
    c0 = jnp.pad(c0, ((0, bp - batch), (0, pad_h)))

    grid_spec = pltpu.PrefetchScalarGridSpec(
        num_scalar_prefetch=0,
        grid=(seq_len // tc,),
        in_specs=[
            pl.BlockSpec((tc, bp, 4 * hp), lambda c: (c, 0, 0)),   # gx chunk
            pl.BlockSpec((hp, 4 * hp), lambda c: (0, 0)),          # W_h (resident)
            pl.BlockSpec((bp, hp), lambda c: (0, 0)),              # h_0
            pl.BlockSpec((bp, hp), lambda c: (0, 0)),              # c_0
        ],
        out_specs=[
            pl.BlockSpec((tc, bp, hp), lambda c: (c, 0, 0)),       # y chunk (time-major)
            pl.BlockSpec((bp, hp), lambda c: (0, 0)),              # h carry / final
            pl.BlockSpec((bp, hp), lambda c: (0, 0)),              # c carry / final
        ],
    )

    y_tm, h_t, c_t = pl.pallas_call(
        _lstm_kernel,
        grid_spec=grid_spec,
        out_shape=(
            jax.ShapeDtypeStruct((seq_len, bp, hp), dtype),
            jax.ShapeDtypeStruct((bp, hp), dtype),
            jax.ShapeDtypeStruct((bp, hp), dtype),
        ),
        compiler_params=pltpu.CompilerParams(
            dimension_semantics=("arbitrary",)),  # recurrence: time is sequential
    )(gx, w_h, h0, c0)

    # Strip padding and return in PyTorch's (batch, seq, hidden) convention.
    y = jnp.transpose(y_tm[:, :batch, :hidden], (1, 0, 2))
    return y, (h_t[:batch, :hidden], c_t[:batch, :hidden])


def manual_lstm_ref(x, params, h_0=None, c_0=None):
    """Pure-JAX reference mirroring the PyTorch forward, for verification."""
    batch, seq_len, _ = x.shape
    hidden = params["W_hi"].shape[0]
    h_t = jnp.zeros((batch, hidden), jnp.float32) if h_0 is None else h_0
    c_t = jnp.zeros((batch, hidden), jnp.float32) if c_0 is None else c_0
    outs = []
    for t in range(seq_len):
        x_t = x[:, t, :]
        i_t = jax.nn.sigmoid(x_t @ params["W_ii"] + h_t @ params["W_hi"] + params["b_i"])
        f_t = jax.nn.sigmoid(x_t @ params["W_if"] + h_t @ params["W_hf"] + params["b_f"])
        o_t = jax.nn.sigmoid(x_t @ params["W_io"] + h_t @ params["W_ho"] + params["b_o"])
        g_t = jnp.tanh(x_t @ params["W_ig"] + h_t @ params["W_hg"] + params["b_g"])
        c_t = f_t * c_t + i_t * g_t
        h_t = o_t * jnp.tanh(c_t)
        outs.append(h_t[:, None, :])
    return jnp.concatenate(outs, axis=1), (h_t, c_t)


def init_params(key, input_dim, hidden_dim):
    scale = 1.0 / hidden_dim ** 0.5
    keys = jax.random.split(key, 8)
    names_in = ["W_ii", "W_if", "W_io", "W_ig"]
    names_h = ["W_hi", "W_hf", "W_ho", "W_hg"]
    params = {}
    for k, n in zip(keys[:4], names_in):
        params[n] = jax.random.normal(k, (input_dim, hidden_dim), jnp.float32) * scale
    for k, n in zip(keys[4:], names_h):
        params[n] = jax.random.normal(k, (hidden_dim, hidden_dim), jnp.float32) * scale
    for n in ["b_i", "b_f", "b_o", "b_g"]:
        params[n] = jnp.zeros((hidden_dim,), jnp.float32)
    return params


if __name__ == "__main__":
    batch, seq_len, input_dim, hidden_dim = 2, 8, 4, 32
    # num_layers is stored by the PyTorch module but unused in its forward; ignored here.

    key = jax.random.PRNGKey(0)
    kx, kp = jax.random.split(key)
    x = jax.random.normal(kx, (batch, seq_len, input_dim), jnp.float32)
    params = init_params(kp, input_dim, hidden_dim)

    y, (h_T, c_T) = manual_lstm_pallas(x, params)
    jax.block_until_ready((y, h_T, c_T))

    y_ref, (h_ref, c_ref) = manual_lstm_ref(x, params)
    assert y.shape == (batch, seq_len, hidden_dim)
    assert h_T.shape == (batch, hidden_dim) and c_T.shape == (batch, hidden_dim)
    assert jnp.allclose(y, y_ref, atol=1e-4, rtol=1e-4)
    assert jnp.allclose(h_T, h_ref, atol=1e-4, rtol=1e-4)
    assert jnp.allclose(c_T, c_ref, atol=1e-4, rtol=1e-4)

    print("KERNEL_OK")
</pallas_src>

<mosaic_0001>
module attributes {stable_mosaic.version = 11 : i64} {
  func.func @_lstm_kernel(%arg0: i32, %arg1: memref<8x8x512xf32, #tpu.memory_space<vmem>>, %arg2: memref<128x512xf32, #tpu.memory_space<vmem>>, %arg3: memref<8x128xf32, #tpu.memory_space<vmem>>, %arg4: memref<8x128xf32, #tpu.memory_space<vmem>>, %arg5: memref<8x8x128xf32, #tpu.memory_space<vmem>>, %arg6: memref<8x128xf32, #tpu.memory_space<vmem>>, %arg7: memref<8x128xf32, #tpu.memory_space<vmem>>) attributes {dimension_semantics = [#tpu.dimension_semantics<arbitrary>], iteration_bounds = array<i64: 1>, scalar_prefetch = 0 : i64, scratch_operands = 0 : i64, tpu.core_type = #tpu.core_type<tc>, window_params = [{transform_indices = @transform_0, window_bounds = array<i64: 8, 8, 512>}, {pipeline_mode = #tpu.pipeline_mode<synchronous>, transform_indices = @transform_1, window_bounds = array<i64: 128, 512>}, {pipeline_mode = #tpu.pipeline_mode<synchronous>, transform_indices = @transform_2, window_bounds = array<i64: 8, 128>}, {pipeline_mode = #tpu.pipeline_mode<synchronous>, transform_indices = @transform_3, window_bounds = array<i64: 8, 128>}, {transform_indices = @transform_4, window_bounds = array<i64: 8, 8, 128>}, {pipeline_mode = #tpu.pipeline_mode<synchronous>, transform_indices = @transform_5, window_bounds = array<i64: 8, 128>}, {pipeline_mode = #tpu.pipeline_mode<synchronous>, transform_indices = @transform_6, window_bounds = array<i64: 8, 128>}]} {
    %c0_i32 = arith.constant 0 : i32
    %0 = arith.cmpi eq, %arg0, %c0_i32 : i32
    %1 = arith.extui %0 : i1 to i32
    %c0_i32_0 = arith.constant 0 : i32
    %2 = arith.cmpi ne, %1, %c0_i32_0 : i32
    scf.if %2 {
      %c0_74 = arith.constant 0 : index
      %c0_75 = arith.constant 0 : index
      %280 = vector.load %arg3[%c0_74, %c0_75] : memref<8x128xf32, #tpu.memory_space<vmem>>, vector<8x128xf32>
      %c0_76 = arith.constant 0 : index
      %c0_77 = arith.constant 0 : index
      %281 = vector.load %arg6[%c0_76, %c0_77] : memref<8x128xf32, #tpu.memory_space<vmem>>, vector<8x128xf32>
      tpu.vector_store %arg6[%c0_76, %c0_77], %280 {strides = array<i32>} : memref<8x128xf32, #tpu.memory_space<vmem>>, vector<8x128xf32>,
      %c0_78 = arith.constant 0 : index
      %c0_79 = arith.constant 0 : index
      %282 = vector.load %arg4[%c0_78, %c0_79] : memref<8x128xf32, #tpu.memory_space<vmem>>, vector<8x128xf32>
      %c0_80 = arith.constant 0 : index
      %c0_81 = arith.constant 0 : index
      %283 = vector.load %arg7[%c0_80, %c0_81] : memref<8x128xf32, #tpu.memory_space<vmem>>, vector<8x128xf32>
      tpu.vector_store %arg7[%c0_80, %c0_81], %282 {strides = array<i32>} : memref<8x128xf32, #tpu.memory_space<vmem>>, vector<8x128xf32>,
    } else {
    }
    %c0 = arith.constant 0 : index
    %c0_1 = arith.constant 0 : index
    %3 = vector.load %arg2[%c0, %c0_1] : memref<128x512xf32, #tpu.memory_space<vmem>>, vector<128x512xf32>
    %c0_2 = arith.constant 0 : index
    %c0_3 = arith.constant 0 : index
    %4 = vector.load %arg6[%c0_2, %c0_3] : memref<8x128xf32, #tpu.memory_space<vmem>>, vector<8x128xf32>
    %c0_4 = arith.constant 0 : index
    %c0_5 = arith.constant 0 : index
    %5 = vector.load %arg7[%c0_4, %c0_5] : memref<8x128xf32, #tpu.memory_space<vmem>>, vector<8x128xf32>
    %c0_i32_6 = arith.constant 0 : i32
    %6 = arith.index_cast %c0_i32_6 : i32 to index
    %c0_7 = arith.constant 0 : index
    %c0_8 = arith.constant 0 : index
    %7 = vector.load %arg1[%6, %c0_7, %c0_8] : memref<8x8x512xf32, #tpu.memory_space<vmem>>, vector<1x8x512xf32>
    %8 = vector.shape_cast %7 : vector<1x8x512xf32> to vector<8x512xf32>
    %cst = arith.constant dense<0.000000e+00> : vector<8x512xf32>
    %9 = tpu.matmul %4, %3, %cst {dimension_numbers = #tpu.dot_dimension_numbers<[1], [0], [0], [1], [0, 0, 1, 1], [], []>} : vector<8x128xf32>, vector<128x512xf32>, vector<8x512xf32> -> vector<8x512xf32>
    %10 = arith.addf %8, %9 : vector<8x512xf32>
    %11 = vector.extract_strided_slice %10 {offsets = [0, 0], sizes = [8, 128], strides = [1, 1]} : vector<8x512xf32> to vector<8x128xf32>
    %12 = arith.negf %11 : vector<8x128xf32>
    %13 = math.exp %12 : vector<8x128xf32>
    %cst_9 = arith.constant 1.000000e+00 : f32
    %14 = vector.broadcast %cst_9 : f32 to vector<8x128xf32>
    %15 = arith.addf %14, %13 : vector<8x128xf32>
    %16 = arith.divf %14, %15 : vector<8x128xf32>
    %17 = vector.extract_strided_slice %10 {offsets = [0, 128], sizes = [8, 128], strides = [1, 1]} : vector<8x512xf32> to vector<8x128xf32>
    %18 = arith.negf %17 : vector<8x128xf32>
    %19 = math.exp %18 : vector<8x128xf32>
    %cst_10 = arith.constant 1.000000e+00 : f32
    %20 = vector.broadcast %cst_10 : f32 to vector<8x128xf32>
    %21 = arith.addf %20, %19 : vector<8x128xf32>
    %22 = arith.divf %20, %21 : vector<8x128xf32>
    %23 = vector.extract_strided_slice %10 {offsets = [0, 256], sizes = [8, 128], strides = [1, 1]} : vector<8x512xf32> to vector<8x128xf32>
    %24 = arith.negf %23 : vector<8x128xf32>
    %25 = math.exp %24 : vector<8x128xf32>
    %cst_11 = arith.constant 1.000000e+00 : f32
    %26 = vector.broadcast %cst_11 : f32 to vector<8x128xf32>
    %27 = arith.addf %26, %25 : vector<8x128xf32>
    %28 = arith.divf %26, %27 : vector<8x128xf32>
    %29 = vector.extract_strided_slice %10 {offsets = [0, 384], sizes = [8, 128], strides = [1, 1]} : vector<8x512xf32> to vector<8x128xf32>
    %30 = math.tanh %29 : vector<8x128xf32>
    %31 = arith.mulf %22, %5 : vector<8x128xf32>
    %32 = arith.mulf %16, %30 : vector<8x128xf32>
    %33 = arith.addf %31, %32 : vector<8x128xf32>
    %34 = math.tanh %33 : vector<8x128xf32>
    %35 = arith.mulf %28, %34 : vector<8x128xf32>
    %36 = arith.index_cast %c0_i32_6 : i32 to index
    %c0_12 = arith.constant 0 : index
    %c0_13 = arith.constant 0 : index
    %37 = vector.load %arg5[%36, %c0_12, %c0_13] : memref<8x8x128xf32, #tpu.memory_space<vmem>>, vector<1x8x128xf32>
    %38 = vector.shape_cast %37 : vector<1x8x128xf32> to vector<8x128xf32>
    %39 = vector.shape_cast %35 : vector<8x128xf32> to vector<1x8x128xf32>
    tpu.vector_store %arg5[%36, %c0_12, %c0_13], %39 {strides = array<i32>} : memref<8x8x128xf32, #tpu.memory_space<vmem>>, vector<1x8x128xf32>,
    %c1_i32 = arith.constant 1 : i32
    %40 = arith.index_cast %c1_i32 : i32 to index
    %c0_14 = arith.constant 0 : index
    %c0_15 = arith.constant 0 : index
    %41 = vector.load %arg1[%40, %c0_14, %c0_15] : memref<8x8x512xf32, #tpu.memory_space<vmem>>, vector<1x8x512xf32>
    %42 = vector.shape_cast %41 : vector<1x8x512xf32> to vector<8x512xf32>
    %cst_16 = arith.constant dense<0.000000e+00> : vector<8x512xf32>
    %43 = tpu.matmul %35, %3, %cst_16 {dimension_numbers = #tpu.dot_dimension_numbers<[1], [0], [0], [1], [0, 0, 1, 1], [], []>} : vector<8x128xf32>, vector<128x512xf32>, vector<8x512xf32> -> vector<8x512xf32>
    %44 = arith.addf %42, %43 : vector<8x512xf32>
    %45 = vector.extract_strided_slice %44 {offsets = [0, 0], sizes = [8, 128], strides = [1, 1]} : vector<8x512xf32> to vector<8x128xf32>
    %46 = arith.negf %45 : vector<8x128xf32>
    %47 = math.exp %46 : vector<8x128xf32>
    %cst_17 = arith.constant 1.000000e+00 : f32
    %48 = vector.broadcast %cst_17 : f32 to vector<8x128xf32>
    %49 = arith.addf %48, %47 : vector<8x128xf32>
    %50 = arith.divf %48, %49 : vector<8x128xf32>
    %51 = vector.extract_strided_slice %44 {offsets = [0, 128], sizes = [8, 128], strides = [1, 1]} : vector<8x512xf32> to vector<8x128xf32>
    %52 = arith.negf %51 : vector<8x128xf32>
    %53 = math.exp %52 : vector<8x128xf32>
    %cst_18 = arith.constant 1.000000e+00 : f32
    %54 = vector.broadcast %cst_18 : f32 to vector<8x128xf32>
    %55 = arith.addf %54, %53 : vector<8x128xf32>
    %56 = arith.divf %54, %55 : vector<8x128xf32>
    %57 = vector.extract_strided_slice %44 {offsets = [0, 256], sizes = [8, 128], strides = [1, 1]} : vector<8x512xf32> to vector<8x128xf32>
    %58 = arith.negf %57 : vector<8x128xf32>
    %59 = math.exp %58 : vector<8x128xf32>
    %cst_19 = arith.constant 1.000000e+00 : f32
    %60 = vector.broadcast %cst_19 : f32 to vector<8x128xf32>
    %61 = arith.addf %60, %59 : vector<8x128xf32>
    %62 = arith.divf %60, %61 : vector<8x128xf32>
    %63 = vector.extract_strided_slice %44 {offsets = [0, 384], sizes = [8, 128], strides = [1, 1]} : vector<8x512xf32> to vector<8x128xf32>
    %64 = math.tanh %63 : vector<8x128xf32>
    %65 = arith.mulf %56, %33 : vector<8x128xf32>
    %66 = arith.mulf %50, %64 : vector<8x128xf32>
    %67 = arith.addf %65, %66 : vector<8x128xf32>
    %68 = math.tanh %67 : vector<8x128xf32>
    %69 = arith.mulf %62, %68 : vector<8x128xf32>
    %70 = arith.index_cast %c1_i32 : i32 to index
    %c0_20 = arith.constant 0 : index
    %c0_21 = arith.constant 0 : index
    %71 = vector.load %arg5[%70, %c0_20, %c0_21] : memref<8x8x128xf32, #tpu.memory_space<vmem>>, vector<1x8x128xf32>
    %72 = vector.shape_cast %71 : vector<1x8x128xf32> to vector<8x128xf32>
    %73 = vector.shape_cast %69 : vector<8x128xf32> to vector<1x8x128xf32>
    tpu.vector_store %arg5[%70, %c0_20, %c0_21], %73 {strides = array<i32>} : memref<8x8x128xf32, #tpu.memory_space<vmem>>, vector<1x8x128xf32>,
    %c2_i32 = arith.constant 2 : i32
    %74 = arith.index_cast %c2_i32 : i32 to index
    %c0_22 = arith.constant 0 : index
    %c0_23 = arith.constant 0 : index
    %75 = vector.load %arg1[%74, %c0_22, %c0_23] : memref<8x8x512xf32, #tpu.memory_space<vmem>>, vector<1x8x512xf32>
    %76 = vector.shape_cast %75 : vector<1x8x512xf32> to vector<8x512xf32>
    %cst_24 = arith.constant dense<0.000000e+00> : vector<8x512xf32>
    %77 = tpu.matmul %69, %3, %cst_24 {dimension_numbers = #tpu.dot_dimension_numbers<[1], [0], [0], [1], [0, 0, 1, 1], [], []>} : vector<8x128xf32>, vector<128x512xf32>, vector<8x512xf32> -> vector<8x512xf32>
    %78 = arith.addf %76, %77 : vector<8x512xf32>
    %79 = vector.extract_strided_slice %78 {offsets = [0, 0], sizes = [8, 128], strides = [1, 1]} : vector<8x512xf32> to vector<8x128xf32>
    %80 = arith.negf %79 : vector<8x128xf32>
    %81 = math.exp %80 : vector<8x128xf32>
    %cst_25 = arith.constant 1.000000e+00 : f32
    %82 = vector.broadcast %cst_25 : f32 to vector<8x128xf32>
    %83 = arith.addf %82, %81 : vector<8x128xf32>
    %84 = arith.divf %82, %83 : vector<8x128xf32>
    %85 = vector.extract_strided_slice %78 {offsets = [0, 128], sizes = [8, 128], strides = [1, 1]} : vector<8x512xf32> to vector<8x128xf32>
    %86 = arith.negf %85 : vector<8x128xf32>
    %87 = math.exp %86 : vector<8x128xf32>
    %cst_26 = arith.constant 1.000000e+00 : f32
    %88 = vector.broadcast %cst_26 : f32 to vector<8x128xf32>
    %89 = arith.addf %88, %87 : vector<8x128xf32>
    %90 = arith.divf %88, %89 : vector<8x128xf32>
    %91 = vector.extract_strided_slice %78 {offsets = [0, 256], sizes = [8, 128], strides = [1, 1]} : vector<8x512xf32> to vector<8x128xf32>
    %92 = arith.negf %91 : vector<8x128xf32>
    %93 = math.exp %92 : vector<8x128xf32>
    %cst_27 = arith.constant 1.000000e+00 : f32
    %94 = vector.broadcast %cst_27 : f32 to vector<8x128xf32>
    %95 = arith.addf %94, %93 : vector<8x128xf32>
    %96 = arith.divf %94, %95 : vector<8x128xf32>
    %97 = vector.extract_strided_slice %78 {offsets = [0, 384], sizes = [8, 128], strides = [1, 1]} : vector<8x512xf32> to vector<8x128xf32>
    %98 = math.tanh %97 : vector<8x128xf32>
    %99 = arith.mulf %90, %67 : vector<8x128xf32>
    %100 = arith.mulf %84, %98 : vector<8x128xf32>
    %101 = arith.addf %99, %100 : vector<8x128xf32>
    %102 = math.tanh %101 : vector<8x128xf32>
    %103 = arith.mulf %96, %102 : vector<8x128xf32>
    %104 = arith.index_cast %c2_i32 : i32 to index
    %c0_28 = arith.constant 0 : index
    %c0_29 = arith.constant 0 : index
    %105 = vector.load %arg5[%104, %c0_28, %c0_29] : memref<8x8x128xf32, #tpu.memory_space<vmem>>, vector<1x8x128xf32>
    %106 = vector.shape_cast %105 : vector<1x8x128xf32> to vector<8x128xf32>
    %107 = vector.shape_cast %103 : vector<8x128xf32> to vector<1x8x128xf32>
    tpu.vector_store %arg5[%104, %c0_28, %c0_29], %107 {strides = array<i32>} : memref<8x8x128xf32, #tpu.memory_space<vmem>>, vector<1x8x128xf32>,
    %c3_i32 = arith.constant 3 : i32
    %108 = arith.index_cast %c3_i32 : i32 to index
    %c0_30 = arith.constant 0 : index
    %c0_31 = arith.constant 0 : index
    %109 = vector.load %arg1[%108, %c0_30, %c0_31] : memref<8x8x512xf32, #tpu.memory_space<vmem>>, vector<1x8x512xf32>
    %110 = vector.shape_cast %109 : vector<1x8x512xf32> to vector<8x512xf32>
    %cst_32 = arith.constant dense<0.000000e+00> : vector<8x512xf32>
    %111 = tpu.matmul %103, %3, %cst_32 {dimension_numbers = #tpu.dot_dimension_numbers<[1], [0], [0], [1], [0, 0, 1, 1], [], []>} : vector<8x128xf32>, vector<128x512xf32>, vector<8x512xf32> -> vector<8x512xf32>
    %112 = arith.addf %110, %111 : vector<8x512xf32>
    %113 = vector.extract_strided_slice %112 {offsets = [0, 0], sizes = [8, 128], strides = [1, 1]} : vector<8x512xf32> to vector<8x128xf32>
    %114 = arith.negf %113 : vector<8x128xf32>
    %115 = math.exp %114 : vector<8x128xf32>
    %cst_33 = arith.constant 1.000000e+00 : f32
    %116 = vector.broadcast %cst_33 : f32 to vector<8x128xf32>
    %117 = arith.addf %116, %115 : vector<8x128xf32>
    %118 = arith.divf %116, %117 : vector<8x128xf32>
    %119 = vector.extract_strided_slice %112 {offsets = [0, 128], sizes = [8, 128], strides = [1, 1]} : vector<8x512xf32> to vector<8x128xf32>
    %120 = arith.negf %119 : vector<8x128xf32>
    %121 = math.exp %120 : vector<8x128xf32>
    %cst_34 = arith.constant 1.000000e+00 : f32
    %122 = vector.broadcast %cst_34 : f32 to vector<8x128xf32>
    %123 = arith.addf %122, %121 : vector<8x128xf32>
    %124 = arith.divf %122, %123 : vector<8x128xf32>
    %125 = vector.extract_strided_slice %112 {offsets = [0, 256], sizes = [8, 128], strides = [1, 1]} : vector<8x512xf32> to vector<8x128xf32>
    %126 = arith.negf %125 : vector<8x128xf32>
    %127 = math.exp %126 : vector<8x128xf32>
    %cst_35 = arith.constant 1.000000e+00 : f32
    %128 = vector.broadcast %cst_35 : f32 to vector<8x128xf32>
    %129 = arith.addf %128, %127 : vector<8x128xf32>
    %130 = arith.divf %128, %129 : vector<8x128xf32>
    %131 = vector.extract_strided_slice %112 {offsets = [0, 384], sizes = [8, 128], strides = [1, 1]} : vector<8x512xf32> to vector<8x128xf32>
    %132 = math.tanh %131 : vector<8x128xf32>
    %133 = arith.mulf %124, %101 : vector<8x128xf32>
    %134 = arith.mulf %118, %132 : vector<8x128xf32>
    %135 = arith.addf %133, %134 : vector<8x128xf32>
    %136 = math.tanh %135 : vector<8x128xf32>
    %137 = arith.mulf %130, %136 : vector<8x128xf32>
    %138 = arith.index_cast %c3_i32 : i32 to index
    %c0_36 = arith.constant 0 : index
    %c0_37 = arith.constant 0 : index
    %139 = vector.load %arg5[%138, %c0_36, %c0_37] : memref<8x8x128xf32, #tpu.memory_space<vmem>>, vector<1x8x128xf32>
    %140 = vector.shape_cast %139 : vector<1x8x128xf32> to vector<8x128xf32>
    %141 = vector.shape_cast %137 : vector<8x128xf32> to vector<1x8x128xf32>
    tpu.vector_store %arg5[%138, %c0_36, %c0_37], %141 {strides = array<i32>} : memref<8x8x128xf32, #tpu.memory_space<vmem>>, vector<1x8x128xf32>,
    %c4_i32 = arith.constant 4 : i32
    %142 = arith.index_cast %c4_i32 : i32 to index
    %c0_38 = arith.constant 0 : index
    %c0_39 = arith.constant 0 : index
    %143 = vector.load %arg1[%142, %c0_38, %c0_39] : memref<8x8x512xf32, #tpu.memory_space<vmem>>, vector<1x8x512xf32>
    %144 = vector.shape_cast %143 : vector<1x8x512xf32> to vector<8x512xf32>
    %cst_40 = arith.constant dense<0.000000e+00> : vector<8x512xf32>
    %145 = tpu.matmul %137, %3, %cst_40 {dimension_numbers = #tpu.dot_dimension_numbers<[1], [0], [0], [1], [0, 0, 1, 1], [], []>} : vector<8x128xf32>, vector<128x512xf32>, vector<8x512xf32> -> vector<8x512xf32>
    %146 = arith.addf %144, %145 : vector<8x512xf32>
    %147 = vector.extract_strided_slice %146 {offsets = [0, 0], sizes = [8, 128], strides = [1, 1]} : vector<8x512xf32> to vector<8x128xf32>
    %148 = arith.negf %147 : vector<8x128xf32>
    %149 = math.exp %148 : vector<8x128xf32>
    %cst_41 = arith.constant 1.000000e+00 : f32
    %150 = vector.broadcast %cst_41 : f32 to vector<8x128xf32>
    %151 = arith.addf %150, %149 : vector<8x128xf32>
    %152 = arith.divf %150, %151 : vector<8x128xf32>
    %153 = vector.extract_strided_slice %146 {offsets = [0, 128], sizes = [8, 128], strides = [1, 1]} : vector<8x512xf32> to vector<8x128xf32>
    %154 = arith.negf %153 : vector<8x128xf32>
    %155 = math.exp %154 : vector<8x128xf32>
    %cst_42 = arith.constant 1.000000e+00 : f32
    %156 = vector.broadcast %cst_42 : f32 to vector<8x128xf32>
    %157 = arith.addf %156, %155 : vector<8x128xf32>
    %158 = arith.divf %156, %157 : vector<8x128xf32>
    %159 = vector.extract_strided_slice %146 {offsets = [0, 256], sizes = [8, 128], strides = [1, 1]} : vector<8x512xf32> to vector<8x128xf32>
    %160 = arith.negf %159 : vector<8x128xf32>
    %161 = math.exp %160 : vector<8x128xf32>
    %cst_43 = arith.constant 1.000000e+00 : f32
    %162 = vector.broadcast %cst_43 : f32 to vector<8x128xf32>
    %163 = arith.addf %162, %161 : vector<8x128xf32>
    %164 = arith.divf %162, %163 : vector<8x128xf32>
    %165 = vector.extract_strided_slice %146 {offsets = [0, 384], sizes = [8, 128], strides = [1, 1]} : vector<8x512xf32> to vector<8x128xf32>
    %166 = math.tanh %165 : vector<8x128xf32>
    %167 = arith.mulf %158, %135 : vector<8x128xf32>
    %168 = arith.mulf %152, %166 : vector<8x128xf32>
    %169 = arith.addf %167, %168 : vector<8x128xf32>
    %170 = math.tanh %169 : vector<8x128xf32>
    %171 = arith.mulf %164, %170 : vector<8x128xf32>
    %172 = arith.index_cast %c4_i32 : i32 to index
    %c0_44 = arith.constant 0 : index
    %c0_45 = arith.constant 0 : index
    %173 = vector.load %arg5[%172, %c0_44, %c0_45] : memref<8x8x128xf32, #tpu.memory_space<vmem>>, vector<1x8x128xf32>
    %174 = vector.shape_cast %173 : vector<1x8x128xf32> to vector<8x128xf32>
    %175 = vector.shape_cast %171 : vector<8x128xf32> to vector<1x8x128xf32>
    tpu.vector_store %arg5[%172, %c0_44, %c0_45], %175 {strides = array<i32>} : memref<8x8x128xf32, #tpu.memory_space<vmem>>, vector<1x8x128xf32>,
    %c5_i32 = arith.constant 5 : i32
    %176 = arith.index_cast %c5_i32 : i32 to index
    %c0_46 = arith.constant 0 : index
    %c0_47 = arith.constant 0 : index
    %177 = vector.load %arg1[%176, %c0_46, %c0_47] : memref<8x8x512xf32, #tpu.memory_space<vmem>>, vector<1x8x512xf32>
    %178 = vector.shape_cast %177 : vector<1x8x512xf32> to vector<8x512xf32>
    %cst_48 = arith.constant dense<0.000000e+00> : vector<8x512xf32>
    %179 = tpu.matmul %171, %3, %cst_48 {dimension_numbers = #tpu.dot_dimension_numbers<[1], [0], [0], [1], [0, 0, 1, 1], [], []>} : vector<8x128xf32>, vector<128x512xf32>, vector<8x512xf32> -> vector<8x512xf32>
    %180 = arith.addf %178, %179 : vector<8x512xf32>
    %181 = vector.extract_strided_slice %180 {offsets = [0, 0], sizes = [8, 128], strides = [1, 1]} : vector<8x512xf32> to vector<8x128xf32>
    %182 = arith.negf %181 : vector<8x128xf32>
    %183 = math.exp %182 : vector<8x128xf32>
    %cst_49 = arith.constant 1.000000e+00 : f32
    %184 = vector.broadcast %cst_49 : f32 to vector<8x128xf32>
    %185 = arith.addf %184, %183 : vector<8x128xf32>
    %186 = arith.divf %184, %185 : vector<8x128xf32>
    %187 = vector.extract_strided_slice %180 {offsets = [0, 128], sizes = [8, 128], strides = [1, 1]} : vector<8x512xf32> to vector<8x128xf32>
    %188 = arith.negf %187 : vector<8x128xf32>
    %189 = math.exp %188 : vector<8x128xf32>
    %cst_50 = arith.constant 1.000000e+00 : f32
    %190 = vector.broadcast %cst_50 : f32 to vector<8x128xf32>
    %191 = arith.addf %190, %189 : vector<8x128xf32>
    %192 = arith.divf %190, %191 : vector<8x128xf32>
    %193 = vector.extract_strided_slice %180 {offsets = [0, 256], sizes = [8, 128], strides = [1, 1]} : vector<8x512xf32> to vector<8x128xf32>
    %194 = arith.negf %193 : vector<8x128xf32>
    %195 = math.exp %194 : vector<8x128xf32>
    %cst_51 = arith.constant 1.000000e+00 : f32
    %196 = vector.broadcast %cst_51 : f32 to vector<8x128xf32>
    %197 = arith.addf %196, %195 : vector<8x128xf32>
    %198 = arith.divf %196, %197 : vector<8x128xf32>
    %199 = vector.extract_strided_slice %180 {offsets = [0, 384], sizes = [8, 128], strides = [1, 1]} : vector<8x512xf32> to vector<8x128xf32>
    %200 = math.tanh %199 : vector<8x128xf32>
    %201 = arith.mulf %192, %169 : vector<8x128xf32>
    %202 = arith.mulf %186, %200 : vector<8x128xf32>
    %203 = arith.addf %201, %202 : vector<8x128xf32>
    %204 = math.tanh %203 : vector<8x128xf32>
    %205 = arith.mulf %198, %204 : vector<8x128xf32>
    %206 = arith.index_cast %c5_i32 : i32 to index
    %c0_52 = arith.constant 0 : index
    %c0_53 = arith.constant 0 : index
    %207 = vector.load %arg5[%206, %c0_52, %c0_53] : memref<8x8x128xf32, #tpu.memory_space<vmem>>, vector<1x8x128xf32>
    %208 = vector.shape_cast %207 : vector<1x8x128xf32> to vector<8x128xf32>
    %209 = vector.shape_cast %205 : vector<8x128xf32> to vector<1x8x128xf32>
    tpu.vector_store %arg5[%206, %c0_52, %c0_53], %209 {strides = array<i32>} : memref<8x8x128xf32, #tpu.memory_space<vmem>>, vector<1x8x128xf32>,
    %c6_i32 = arith.constant 6 : i32
    %210 = arith.index_cast %c6_i32 : i32 to index
    %c0_54 = arith.constant 0 : index
    %c0_55 = arith.constant 0 : index
    %211 = vector.load %arg1[%210, %c0_54, %c0_55] : memref<8x8x512xf32, #tpu.memory_space<vmem>>, vector<1x8x512xf32>
    %212 = vector.shape_cast %211 : vector<1x8x512xf32> to vector<8x512xf32>
    %cst_56 = arith.constant dense<0.000000e+00> : vector<8x512xf32>
    %213 = tpu.matmul %205, %3, %cst_56 {dimension_numbers = #tpu.dot_dimension_numbers<[1], [0], [0], [1], [0, 0, 1, 1], [], []>} : vector<8x128xf32>, vector<128x512xf32>, vector<8x512xf32> -> vector<8x512xf32>
    %214 = arith.addf %212, %213 : vector<8x512xf32>
    %215 = vector.extract_strided_slice %214 {offsets = [0, 0], sizes = [8, 128], strides = [1, 1]} : vector<8x512xf32> to vector<8x128xf32>
    %216 = arith.negf %215 : vector<8x128xf32>
    %217 = math.exp %216 : vector<8x128xf32>
    %cst_57 = arith.constant 1.000000e+00 : f32
    %218 = vector.broadcast %cst_57 : f32 to vector<8x128xf32>
    %219 = arith.addf %218, %217 : vector<8x128xf32>
    %220 = arith.divf %218, %219 : vector<8x128xf32>
    %221 = vector.extract_strided_slice %214 {offsets = [0, 128], sizes = [8, 128], strides = [1, 1]} : vector<8x512xf32> to vector<8x128xf32>
    %222 = arith.negf %221 : vector<8x128xf32>
    %223 = math.exp %222 : vector<8x128xf32>
    %cst_58 = arith.constant 1.000000e+00 : f32
    %224 = vector.broadcast %cst_58 : f32 to vector<8x128xf32>
    %225 = arith.addf %224, %223 : vector<8x128xf32>
    %226 = arith.divf %224, %225 : vector<8x128xf32>
    %227 = vector.extract_strided_slice %214 {offsets = [0, 256], sizes = [8, 128], strides = [1, 1]} : vector<8x512xf32> to vector<8x128xf32>
    %228 = arith.negf %227 : vector<8x128xf32>
    %229 = math.exp %228 : vector<8x128xf32>
    %cst_59 = arith.constant 1.000000e+00 : f32
    %230 = vector.broadcast %cst_59 : f32 to vector<8x128xf32>
    %231 = arith.addf %230, %229 : vector<8x128xf32>
    %232 = arith.divf %230, %231 : vector<8x128xf32>
    %233 = vector.extract_strided_slice %214 {offsets = [0, 384], sizes = [8, 128], strides = [1, 1]} : vector<8x512xf32> to vector<8x128xf32>
    %234 = math.tanh %233 : vector<8x128xf32>
    %235 = arith.mulf %226, %203 : vector<8x128xf32>
    %236 = arith.mulf %220, %234 : vector<8x128xf32>
    %237 = arith.addf %235, %236 : vector<8x128xf32>
    %238 = math.tanh %237 : vector<8x128xf32>
    %239 = arith.mulf %232, %238 : vector<8x128xf32>
    %240 = arith.index_cast %c6_i32 : i32 to index
    %c0_60 = arith.constant 0 : index
    %c0_61 = arith.constant 0 : index
    %241 = vector.load %arg5[%240, %c0_60, %c0_61] : memref<8x8x128xf32, #tpu.memory_space<vmem>>, vector<1x8x128xf32>
    %242 = vector.shape_cast %241 : vector<1x8x128xf32> to vector<8x128xf32>
    %243 = vector.shape_cast %239 : vector<8x128xf32> to vector<1x8x128xf32>
    tpu.vector_store %arg5[%240, %c0_60, %c0_61], %243 {strides = array<i32>} : memref<8x8x128xf32, #tpu.memory_space<vmem>>, vector<1x8x128xf32>,
    %c7_i32 = arith.constant 7 : i32
    %244 = arith.index_cast %c7_i32 : i32 to index
    %c0_62 = arith.constant 0 : index
    %c0_63 = arith.constant 0 : index
    %245 = vector.load %arg1[%244, %c0_62, %c0_63] : memref<8x8x512xf32, #tpu.memory_space<vmem>>, vector<1x8x512xf32>
    %246 = vector.shape_cast %245 : vector<1x8x512xf32> to vector<8x512xf32>
    %cst_64 = arith.constant dense<0.000000e+00> : vector<8x512xf32>
    %247 = tpu.matmul %239, %3, %cst_64 {dimension_numbers = #tpu.dot_dimension_numbers<[1], [0], [0], [1], [0, 0, 1, 1], [], []>} : vector<8x128xf32>, vector<128x512xf32>, vector<8x512xf32> -> vector<8x512xf32>
    %248 = arith.addf %246, %247 : vector<8x512xf32>
    %249 = vector.extract_strided_slice %248 {offsets = [0, 0], sizes = [8, 128], strides = [1, 1]} : vector<8x512xf32> to vector<8x128xf32>
    %250 = arith.negf %249 : vector<8x128xf32>
    %251 = math.exp %250 : vector<8x128xf32>
    %cst_65 = arith.constant 1.000000e+00 : f32
    %252 = vector.broadcast %cst_65 : f32 to vector<8x128xf32>
    %253 = arith.addf %252, %251 : vector<8x128xf32>
    %254 = arith.divf %252, %253 : vector<8x128xf32>
    %255 = vector.extract_strided_slice %248 {offsets = [0, 128], sizes = [8, 128], strides = [1, 1]} : vector<8x512xf32> to vector<8x128xf32>
    %256 = arith.negf %255 : vector<8x128xf32>
    %257 = math.exp %256 : vector<8x128xf32>
    %cst_66 = arith.constant 1.000000e+00 : f32
    %258 = vector.broadcast %cst_66 : f32 to vector<8x128xf32>
    %259 = arith.addf %258, %257 : vector<8x128xf32>
    %260 = arith.divf %258, %259 : vector<8x128xf32>
    %261 = vector.extract_strided_slice %248 {offsets = [0, 256], sizes = [8, 128], strides = [1, 1]} : vector<8x512xf32> to vector<8x128xf32>
    %262 = arith.negf %261 : vector<8x128xf32>
    %263 = math.exp %262 : vector<8x128xf32>
    %cst_67 = arith.constant 1.000000e+00 : f32
    %264 = vector.broadcast %cst_67 : f32 to vector<8x128xf32>
    %265 = arith.addf %264, %263 : vector<8x128xf32>
    %266 = arith.divf %264, %265 : vector<8x128xf32>
    %267 = vector.extract_strided_slice %248 {offsets = [0, 384], sizes = [8, 128], strides = [1, 1]} : vector<8x512xf32> to vector<8x128xf32>
    %268 = math.tanh %267 : vector<8x128xf32>
    %269 = arith.mulf %260, %237 : vector<8x128xf32>
    %270 = arith.mulf %254, %268 : vector<8x128xf32>
    %271 = arith.addf %269, %270 : vector<8x128xf32>
    %272 = math.tanh %271 : vector<8x128xf32>
    %273 = arith.mulf %266, %272 : vector<8x128xf32>
    %274 = arith.index_cast %c7_i32 : i32 to index
    %c0_68 = arith.constant 0 : index
    %c0_69 = arith.constant 0 : index
    %275 = vector.load %arg5[%274, %c0_68, %c0_69] : memref<8x8x128xf32, #tpu.memory_space<vmem>>, vector<1x8x128xf32>
    %276 = vector.shape_cast %275 : vector<1x8x128xf32> to vector<8x128xf32>
    %277 = vector.shape_cast %273 : vector<8x128xf32> to vector<1x8x128xf32>
    tpu.vector_store %arg5[%274, %c0_68, %c0_69], %277 {strides = array<i32>} : memref<8x8x128xf32, #tpu.memory_space<vmem>>, vector<1x8x128xf32>,
    %c8_i32 = arith.constant 8 : i32
    %c0_70 = arith.constant 0 : index
    %c0_71 = arith.constant 0 : index
    %278 = vector.load %arg6[%c0_70, %c0_71] : memref<8x128xf32, #tpu.memory_space<vmem>>, vector<8x128xf32>
    tpu.vector_store %arg6[%c0_70, %c0_71], %273 {strides = array<i32>} : memref<8x128xf32, #tpu.memory_space<vmem>>, vector<8x128xf32>,
    %c0_72 = arith.constant 0 : index
    %c0_73 = arith.constant 0 : index
    %279 = vector.load %arg7[%c0_72, %c0_73] : memref<8x128xf32, #tpu.memory_space<vmem>>, vector<8x128xf32>
    tpu.vector_store %arg7[%c0_72, %c0_73], %271 {strides = array<i32>} : memref<8x128xf32, #tpu.memory_space<vmem>>, vector<8x128xf32>,
    return
  }
  func.func @transform_0(%arg0: i32) -> (i32, i32, i32) {
    %c0_i32 = arith.constant 0 : i32
    %c0_i32_0 = arith.constant 0 : i32
    %c0_i32_1 = arith.constant 0 : i32
    return %arg0, %c0_i32, %c0_i32_0 : i32, i32, i32
  }
  func.func @transform_1(%arg0: i32) -> (i32, i32) {
    %c0_i32 = arith.constant 0 : i32
    %c0_i32_0 = arith.constant 0 : i32
    %c0_i32_1 = arith.constant 0 : i32
    return %c0_i32, %c0_i32_0 : i32, i32
  }
  func.func @transform_2(%arg0: i32) -> (i32, i32) {
    %c0_i32 = arith.constant 0 : i32
    %c0_i32_0 = arith.constant 0 : i32
    %c0_i32_1 = arith.constant 0 : i32
    return %c0_i32, %c0_i32_0 : i32, i32
  }
  func.func @transform_3(%arg0: i32) -> (i32, i32) {
    %c0_i32 = arith.constant 0 : i32
    %c0_i32_0 = arith.constant 0 : i32
    %c0_i32_1 = arith.constant 0 : i32
    return %c0_i32, %c0_i32_0 : i32, i32
  }
  func.func @transform_4(%arg0: i32) -> (i32, i32, i32) {
    %c0_i32 = arith.constant 0 : i32
    %c0_i32_0 = arith.constant 0 : i32
    %c0_i32_1 = arith.constant 0 : i32
    return %arg0, %c0_i32, %c0_i32_0 : i32, i32, i32
  }
  func.func @transform_5(%arg0: i32) -> (i32, i32) {
    %c0_i32 = arith.constant 0 : i32
    %c0_i32_0 = arith.constant 0 : i32
    %c0_i32_1 = arith.constant 0 : i32
    return %c0_i32, %c0_i32_0 : i32, i32
  }
  func.func @transform_6(%arg0: i32) -> (i32, i32) {
    %c0_i32 = arith.constant 0 : i32
    %c0_i32_0 = arith.constant 0 : i32
    %c0_i32_1 = arith.constant 0 : i32
    return %c0_i32, %c0_i32_0 : i32, i32
  }
}

</mosaic_0001>

<llo_original>
// kernel: tpu_custom_call.1
$region0: #{tpu_custom_call.1}
  #allocation0 [shape = 'u32[]', space=smem, size = 0x4, offset = 0x4, fixed_abs, tag = 'smem constant byte address 0x4 - core index']
  #allocation1 [shape = 'u32[72,128]{1,0:T(1,128)}', space=vmem, size = 0x9000, scoped, tag = 'internal scratch']
  %s0 = inlined_call_operand.hbm [shape: f32[8,8,512], index: 0, kind: input, shape index: {}]
  %s1 = inlined_call_operand.hbm [shape: f32[128,512], index: 1, kind: input, shape index: {}]
  %s2 = inlined_call_operand.hbm [shape: f32[8,128], index: 2, kind: input, shape index: {}]
  %s3 = inlined_call_operand.hbm [shape: f32[8,128], index: 3, kind: input, shape index: {}]
  %s4 = inlined_call_operand.hbm [shape: f32[8,8,128], index: 4, kind: output, shape index: {0}]
  %s5 = inlined_call_operand.hbm [shape: f32[8,128], index: 5, kind: output, shape index: {1}]
  %s6 = inlined_call_operand.hbm [shape: f32[8,128], index: 6, kind: output, shape index: {2}]
  %7 = xla_tuple %s4, %s5, %s6
  %s8 = sld [smem:[#allocation0]]
  $region62: #{tpu_custom_call.1} parent=0
    _
  %s10 = ssub.s32 1, %s8
  %s11 = scalar_select 0, %s10, %s8
  $region1: #{tpu_custom_call.1} parent=0
    #allocation2 [shape = 'u8[131072]{0}', space=vmem, size = 0x20000, scoped, tag = 'input window, operand 0, single buffered']
    #allocation3 [shape = 's32[1]{0}', space=sflag, size = 0x4, scoped, tag = 'scoped memory for tpu_custom_call.1']
    #allocation4 [shape = 's32[1]{0}', space=sflag, size = 0x4, scoped, tag = 'scoped memory for tpu_custom_call.1']
    #allocation5 [shape = 'u8[262144]{0}', space=vmem, size = 0x40000, scoped, tag = 'input window, operand 1, single buffered']
    #allocation6 [shape = 's32[1]{0}', space=sflag, size = 0x4, scoped, tag = 'scoped memory for tpu_custom_call.1']
    #allocation7 [shape = 'u8[4096]{0}', space=vmem, size = 0x1000, scoped, tag = 'input window, operand 2, single buffered']
    #allocation8 [shape = 'u8[4096]{0}', space=vmem, size = 0x1000, scoped, tag = 'input window, operand 3, single buffered']
    #allocation9 [shape = 's32[1]{0}', space=sflag, size = 0x4, scoped, tag = 'scoped memory for tpu_custom_call.1']
    #allocation10 [shape = 'u8[32768]{0}', space=vmem, size = 0x8000, scoped, tag = 'output window, operand 0, single buffered']
    #allocation11 [shape = 'u8[4096]{0}', space=vmem, size = 0x1000, scoped, tag = 'output window, operand 1, single buffered']
    #allocation12 [shape = 's32[1]{0}', space=sflag, size = 0x4, scoped, tag = 'scoped memory for tpu_custom_call.1']
    #allocation13 [shape = 'u8[4096]{0}', space=vmem, size = 0x1000, scoped, tag = 'output window, operand 2, single buffered']
    %12 = vsyncpa [#allocation3], 0
    %13 = vsyncpa [#allocation6], 0
    %14 = vsyncpa [#allocation9], 0
    %15 = vsyncpa [#allocation4], 0
    %16 = vsyncpa [#allocation12], 0
    // Predicated region
    $region2: #{tpu_custom_call.1} parent=1 // pred_check
      _
    $region3: #{tpu_custom_call.1} parent=1 // pred_check_branch
      %18 = sbr.rel (0) target = $region5
    $region4: #{tpu_custom_call.1} parent=1 // pred_region
      %20 = vsyncadd [#allocation3], 0
      %s21 = sshll.u32 %s0, 4
      %s22 = int_to_ptr.hbm [resolvable:$true] %s21
      %s23 = sshll.u32 [#allocation2], 4
      %s24 = int_to_ptr.vmem [resolvable:$true] %s23
      %29 = dma.hbm_to_vmem [thread:$0]  %s22, 4096, %s24, [#allocation3], 512, 512, 32
    $region5: #{tpu_custom_call.1} parent=1 // pred_fallthru
      _
    // Predicated region
    $region6: #{tpu_custom_call.1} parent=1 // pred_check
      _
    $region7: #{tpu_custom_call.1} parent=1 // pred_check_branch
      %31 = sbr.rel (0) target = $region9
    $region8: #{tpu_custom_call.1} parent=1 // pred_region
      %33 = vsyncadd [#allocation6], 0
      %s34 = sshll.u32 %s1, 4
      %s35 = int_to_ptr.hbm [resolvable:$true] %s34
      %s36 = sshll.u32 [#allocation5], 4
      %s37 = int_to_ptr.vmem [resolvable:$true] %s36
      %42 = dma.hbm_to_vmem [thread:$0]  %s35, 8192, %s37, [#allocation6], 512, 512, 32
    $region9: #{tpu_custom_call.1} parent=1 // pred_fallthru
      _
    // Predicated region
    $region10: #{tpu_custom_call.1} parent=1 // pred_check
      _
    $region11: #{tpu_custom_call.1} parent=1 // pred_check_branch
      %44 = sbr.rel (0) target = $region13
    $region12: #{tpu_custom_call.1} parent=1 // pred_region
      %46 = vsyncadd [#allocation6], 0
      %s48 = sshll.u32 %s2, 4
      %s49 = int_to_ptr.hbm [resolvable:$true] %s48
      %s50 = sshll.u32 [#allocation7], 4
      %s51 = int_to_ptr.vmem [resolvable:$true] %s50
      %53 = dma.hbm_to_vmem [thread:$0]  %s49, 128, %s51, [#allocation6]
    $region13: #{tpu_custom_call.1} parent=1 // pred_fallthru
      _
    // Predicated region
    $region14: #{tpu_custom_call.1} parent=1 // pred_check
      _
    $region15: #{tpu_custom_call.1} parent=1 // pred_check_branch
      %55 = sbr.rel (0) target = $region17
    $region16: #{tpu_custom_call.1} parent=1 // pred_region
      %57 = vsyncadd [#allocation9], 0
      %s59 = sshll.u32 %s3, 4
      %s60 = int_to_ptr.hbm [resolvable:$true] %s59
      %s61 = sshll.u32 [#allocation8], 4
      %s62 = int_to_ptr.vmem [resolvable:$true] %s61
      %64 = dma.hbm_to_vmem [thread:$0]  %s60, 128, %s62, [#allocation9]
    $region17: #{tpu_custom_call.1} parent=1 // pred_fallthru
      _
    // Predicated region
    $region18: #{tpu_custom_call.1} parent=1 // pred_check
      _
    $region19: #{tpu_custom_call.1} parent=1 // pred_check_branch
      %66 = sbr.rel (0) target = $region21
    $region20: #{tpu_custom_call.1} parent=1 // pred_region
      %68 = dma.done [#allocation3], 4096
    $region21: #{tpu_custom_call.1} parent=1 // pred_fallthru
      _
    // Predicated region
    $region22: #{tpu_custom_call.1} parent=1 // pred_check
      _
    $region23: #{tpu_custom_call.1} parent=1 // pred_check_branch
      %70 = sbr.rel (0) target = $region25
    $region24: #{tpu_custom_call.1} parent=1 // pred_region
      %72 = dma.done [#allocation6], 8192
    $region25: #{tpu_custom_call.1} parent=1 // pred_fallthru
      _
    // Predicated region
    $region26: #{tpu_custom_call.1} parent=1 // pred_check
      _
    $region27: #{tpu_custom_call.1} parent=1 // pred_check_branch
      %74 = sbr.rel (0) target = $region29
    $region28: #{tpu_custom_call.1} parent=1 // pred_region
      %76 = dma.done [#allocation6], 128
    $region29: #{tpu_custom_call.1} parent=1 // pred_fallthru
      _
    // Predicated region
    $region30: #{tpu_custom_call.1} parent=1 // pred_check
      _
    $region31: #{tpu_custom_call.1} parent=1 // pred_check_branch
      %78 = sbr.rel (0) target = $region33
    $region32: #{tpu_custom_call.1} parent=1 // pred_region
      %80 = dma.done [#allocation9], 128
    $region33: #{tpu_custom_call.1} parent=1 // pred_fallthru
      _
    %p81 = scmp.eq.s32.totalorder 0, 0
    // Predicated region
    $region34: #{tpu_custom_call.1} parent=1 // pred_check
      %p82 = pneg %p81
    $region35: #{tpu_custom_call.1} parent=1 // pred_check_branch
      %84 = sbr.rel (%p82) target = $region37
    $region36: #{tpu_custom_call.1} parent=1 // pred_region
      %v85 = vld [vmem:[#allocation7] sm:$0xff]
      %86 = vst [vmem:[#allocation11] sm:$0xff] %v85
      %v87 = vld [vmem:[#allocation8] sm:$0xff]
      %88 = vst [vmem:[#allocation13] sm:$0xff] %v87
    $region37: #{tpu_custom_call.1} parent=1 // pred_fallthru
      _
    %v89 = vld [vmem:[#allocation5] sm:$0xff]
    %v90 = vld [vmem:[#allocation5 + $0x8] sm:$0xff]
    %v91 = vld [vmem:[#allocation5 + $0x10] sm:$0xff]
    %v92 = vld [vmem:[#allocation5 + $0x18] sm:$0xff]
    %v93 = vld [vmem:[#allocation5 + $0x20] sm:$0xff]
    %v94 = vld [vmem:[#allocation5 + $0x28] sm:$0xff]
    %v95 = vld [vmem:[#allocation5 + $0x30] sm:$0xff]
    %v96 = vld [vmem:[#allocation5 + $0x38] sm:$0xff]
    %v97 = vld [vmem:[#allocation5 + $0x40] sm:$0xff]
    %v98 = vld [vmem:[#allocation5 + $0x48] sm:$0xff]
    %v99 = vld [vmem:[#allocation5 + $0x50] sm:$0xff]
    %v100 = vld [vmem:[#allocation5 + $0x58] sm:$0xff]
    %v101 = vld [vmem:[#allocation5 + $0x60] sm:$0xff]
    %v102 = vld [vmem:[#allocation5 + $0x68] sm:$0xff]
    %v103 = vld [vmem:[#allocation5 + $0x70] sm:$0xff]
    %v104 = vld [vmem:[#allocation5 + $0x78] sm:$0xff]
    %v105 = vld [vmem:[#allocation5 + $0x80] sm:$0xff]
    %v106 = vld [vmem:[#allocation5 + $0x88] sm:$0xff]
    %v107 = vld [vmem:[#allocation5 + $0x90] sm:$0xff]
    %v108 = vld [vmem:[#allocation5 + $0x98] sm:$0xff]
    %v109 = vld [vmem:[#allocation5 + $0xa0] sm:$0xff]
    %v110 = vld [vmem:[#allocation5 + $0xa8] sm:$0xff]
    %v111 = vld [vmem:[#allocation5 + $0xb0] sm:$0xff]
    %v112 = vld [vmem:[#allocation5 + $0xb8] sm:$0xff]
    %v113 = vld [vmem:[#allocation5 + $0xc0] sm:$0xff]
    %v114 = vld [vmem:[#allocation5 + $0xc8] sm:$0xff]
    %v115 = vld [vmem:[#allocation5 + $0xd0] sm:$0xff]
    %v116 = vld [vmem:[#allocation5 + $0xd8] sm:$0xff]
    %v117 = vld [vmem:[#allocation5 + $0xe0] sm:$0xff]
    %v118 = vld [vmem:[#allocation5 + $0xe8] sm:$0xff]
    %v119 = vld [vmem:[#allocation5 + $0xf0] sm:$0xff]
    %v120 = vld [vmem:[#allocation5 + $0xf8] sm:$0xff]
    %v121 = vld [vmem:[#allocation5 + $0x100] sm:$0xff]
    %v122 = vld [vmem:[#allocation5 + $0x108] sm:$0xff]
    %v123 = vld [vmem:[#allocation5 + $0x110] sm:$0xff]
    %v124 = vld [vmem:[#allocation5 + $0x118] sm:$0xff]
    %v125 = vld [vmem:[#allocation5 + $0x120] sm:$0xff]
    %v126 = vld [vmem:[#allocation5 + $0x128] sm:$0xff]
    %v127 = vld [vmem:[#allocation5 + $0x130] sm:$0xff]
    %v128 = vld [vmem:[#allocation5 + $0x138] sm:$0xff]
    %v129 = vld [vmem:[#allocation5 + $0x140] sm:$0xff]
    %v130 = vld [vmem:[#allocation5 + $0x148] sm:$0xff]
    %v131 = vld [vmem:[#allocation5 + $0x150] sm:$0xff]
    %v132 = vld [vmem:[#allocation5 + $0x158] sm:$0xff]
    %v133 = vld [vmem:[#allocation5 + $0x160] sm:$0xff]
    %v134 = vld [vmem:[#allocation5 + $0x168] sm:$0xff]
    %v135 = vld [vmem:[#allocation5 + $0x170] sm:$0xff]
    %v136 = vld [vmem:[#allocation5 + $0x178] sm:$0xff]
    %v137 = vld [vmem:[#allocation5 + $0x180] sm:$0xff]
    %v138 = vld [vmem:[#allocation5 + $0x188] sm:$0xff]
    %v139 = vld [vmem:[#allocation5 + $0x190] sm:$0xff]
    %v140 = vld [vmem:[#allocation5 + $0x198] sm:$0xff]
    %v141 = vld [vmem:[#allocation5 + $0x1a0] sm:$0xff]
    %v142 = vld [vmem:[#allocation5 + $0x1a8] sm:$0xff]
    %v143 = vld [vmem:[#allocation5 + $0x1b0] sm:$0xff]
    %v144 = vld [vmem:[#allocation5 + $0x1b8] sm:$0xff]
    %v145 = vld [vmem:[#allocation5 + $0x1c0] sm:$0xff]
    %v146 = vld [vmem:[#allocation5 + $0x1c8] sm:$0xff]
    %v147 = vld [vmem:[#allocation5 + $0x1d0] sm:$0xff]
    %v148 = vld [vmem:[#allocation5 + $0x1d8] sm:$0xff]
    %v149 = vld [vmem:[#allocation5 + $0x1e0] sm:$0xff]
    %v150 = vld [vmem:[#allocation5 + $0x1e8] sm:$0xff]
    %v151 = vld [vmem:[#allocation5 + $0x1f0] sm:$0xff]
    %v152 = vld [vmem:[#allocation5 + $0x1f8] sm:$0xff]
    %v153 = vld [vmem:[#allocation11] sm:$0xff]
    %v154 = vld [vmem:[#allocation13] sm:$0xff]
    %v155 = vld [vmem:[#allocation2] sm:$0xff]
    %v156 = vld [vmem:[#allocation2 + $0x8] sm:$0xff]
    %v157 = vld [vmem:[#allocation2 + $0x10] sm:$0xff]
    %v158 = vld [vmem:[#allocation2 + $0x18] sm:$0xff]
    %159 = vmatpush.msra.mxu0 %v149
    %160 = vmatpush.msra.mxu0 %v145
    %161 = vmatpush.msra.mxu0 %v141
    %162 = vmatpush.msra.mxu0 %v137
    %163 = vmatpush.msra.mxu0 %v133
    %164 = vmatpush.msra.mxu0 %v129
    %165 = vmatpush.msra.mxu0 %v125
    %166 = vmatpush.msra.mxu0 %v121
    %167 = vmatpush.msra.mxu0 %v117
    %168 = vmatpush.msra.mxu0 %v113
    %169 = vmatpush.msra.mxu0 %v109
    %170 = vmatpush.msra.mxu0 %v105
    %171 = vmatpush.msra.mxu0 %v101
    %172 = vmatpush.msra.mxu0 %v97
    %173 = vmatpush.msra.mxu0 %v93
    %174 = vmatpush.msra.mxu0 %v89
    %175 = vmatmul.f32.gmra.mxu0 %v153
    %v176 = vpop.f32.mrf.mxu0
    %v177 = vadd.f32 0.0, %v176
    %178 = vdwg.mxu0
    %179 = vmatpush.msra.mxu0 %v150
    %180 = vmatpush.msra.mxu0 %v146
    %181 = vmatpush.msra.mxu0 %v142
    %182 = vmatpush.msra.mxu0 %v138
    %183 = vmatpush.msra.mxu0 %v134
    %184 = vmatpush.msra.mxu0 %v130
    %185 = vmatpush.msra.mxu0 %v126
    %186 = vmatpush.msra.mxu0 %v122
    %187 = vmatpush.msra.mxu0 %v118
    %188 = vmatpush.msra.mxu0 %v114
    %189 = vmatpush.msra.mxu0 %v110
    %190 = vmatpush.msra.mxu0 %v106
    %191 = vmatpush.msra.mxu0 %v102
    %192 = vmatpush.msra.mxu0 %v98
    %193 = vmatpush.msra.mxu0 %v94
    %194 = vmatpush.msra.mxu0 %v90
    %195 = vmatmul.f32.gmra.mxu0 %v153
    %v196 = vpop.f32.mrf.mxu0
    %v197 = vadd.f32 0.0, %v196
    %198 = vdwg.mxu0
    %199 = vmatpush.msra.mxu0 %v151
    %200 = vmatpush.msra.mxu0 %v147
    %201 = vmatpush.msra.mxu0 %v143
    %202 = vmatpush.msra.mxu0 %v139
    %203 = vmatpush.msra.mxu0 %v135
    %204 = vmatpush.msra.mxu0 %v131
    %205 = vmatpush.msra.mxu0 %v127
    %206 = vmatpush.msra.mxu0 %v123
    %207 = vmatpush.msra.mxu0 %v119
    %208 = vmatpush.msra.mxu0 %v115
    %209 = vmatpush.msra.mxu0 %v111
    %210 = vmatpush.msra.mxu0 %v107
    %211 = vmatpush.msra.mxu0 %v103
    %212 = vmatpush.msra.mxu0 %v99
    %213 = vmatpush.msra.mxu0 %v95
    %214 = vmatpush.msra.mxu0 %v91
    %215 = vmatmul.f32.gmra.mxu0 %v153
    %v216 = vpop.f32.mrf.mxu0
    %v217 = vadd.f32 0.0, %v216
    %218 = vdwg.mxu0
    %219 = vmatpush.msra.mxu0 %v152
    %220 = vmatpush.msra.mxu0 %v148
    %221 = vmatpush.msra.mxu0 %v144
    %222 = vmatpush.msra.mxu0 %v140
    %223 = vmatpush.msra.mxu0 %v136
    %224 = vmatpush.msra.mxu0 %v132
    %225 = vmatpush.msra.mxu0 %v128
    %226 = vmatpush.msra.mxu0 %v124
    %227 = vmatpush.msra.mxu0 %v120
    %228 = vmatpush.msra.mxu0 %v116
    %229 = vmatpush.msra.mxu0 %v112
    %230 = vmatpush.msra.mxu0 %v108
    %231 = vmatpush.msra.mxu0 %v104
    %232 = vmatpush.msra.mxu0 %v100
    %233 = vmatpush.msra.mxu0 %v96
    %234 = vmatpush.msra.mxu0 %v92
    %235 = vmatmul.f32.gmra.mxu0 %v153
    %v236 = vpop.f32.mrf.mxu0
    %v237 = vadd.f32 0.0, %v236
    %238 = vdwg.mxu0
    %v239 = vadd.f32 %v155, %v177
    %v240 = vadd.f32 %v156, %v197
    %v241 = vadd.f32 %v157, %v217
    %v242 = vadd.f32 %v158, %v237
    %v243 = vxor.u32 %v239, 2147483648
    %v244 = vmul.f32 %v243, 1.442695
    %v245 = vpow.pop %v244
    %v246 = vadd.f32 %v245, 1.0
    %v247 = vrcp.pop %v246
    %v248 = vmul.f32 %v246, %v247
    %v249 = vsub.f32 1.0, %v248
    %v250 = vmul.f32 %v247, %v249
    %v251 = vadd.f32 %v247, %v250
    %vm252 = vweird.f32 %v246
    %vm253 = vweird.f32 %v247
    %vm254 = vmor %vm252, %vm253
    %v255 = vsel %vm254, %v247, %v251
    %v256 = vand.u32 2147483647, %v246
    %vm257 = vcmp.eq.f32.partialorder %v256, 8.507059e+37
    %v258 = vand.u32 %v246, 2147483648
    %v259 = vor.u32 1.1754944e-38, %v258
    %v260 = vsel %vm257, %v259, %v255
    %v261 = vmul.f32 1.0, %v260
    %v262 = vxor.u32 %v240, 2147483648
    %v263 = vmul.f32 %v262, 1.442695
    %v264 = vpow.pop %v263
    %v265 = vadd.f32 %v264, 1.0
    %v266 = vrcp.pop %v265
    %v267 = vmul.f32 %v265, %v266
    %v268 = vsub.f32 1.0, %v267
    %v269 = vmul.f32 %v266, %v268
    %v270 = vadd.f32 %v266, %v269
    %vm271 = vweird.f32 %v265
    %vm272 = vweird.f32 %v266
    %vm273 = vmor %vm271, %vm272
    %v274 = vsel %vm273, %v266, %v270
    %v275 = vand.u32 2147483647, %v265
    %vm276 = vcmp.eq.f32.partialorder %v275, 8.507059e+37
    %v277 = vand.u32 %v265, 2147483648
    %v278 = vor.u32 1.1754944e-38, %v277
    %v279 = vsel %vm276, %v278, %v274
    %v280 = vmul.f32 1.0, %v279
    %v281 = vxor.u32 %v241, 2147483648
    %v282 = vmul.f32 %v281, 1.442695
    %v283 = vpow.pop %v282
    %v284 = vadd.f32 %v283, 1.0
    %v285 = vrcp.pop %v284
    %v286 = vmul.f32 %v284, %v285
    %v287 = vsub.f32 1.0, %v286
    %v288 = vmul.f32 %v285, %v287
    %v289 = vadd.f32 %v285, %v288
    %vm290 = vweird.f32 %v284
    %vm291 = vweird.f32 %v285
    %vm292 = vmor %vm290, %vm291
    %v293 = vsel %vm292, %v285, %v289
    %v294 = vand.u32 2147483647, %v284
    %vm295 = vcmp.eq.f32.partialorder %v294, 8.507059e+37
    %v296 = vand.u32 %v284, 2147483648
    %v297 = vor.u32 1.1754944e-38, %v296
    %v298 = vsel %vm295, %v297, %v293
    %v299 = vmul.f32 1.0, %v298
    %v300 = vtanh.pop %v242
    %v301 = vmul.f32 %v280, %v154
    %v302 = vmul.f32 %v261, %v300
    %v303 = vadd.f32 %v301, %v302
    %v304 = vtanh.pop %v303
    %v305 = vmul.f32 %v299, %v304
    %306 = vst [vmem:[#allocation10] sm:$0xff] %v305
    %s307 = scalar_lea.vmem [#allocation2], 32
    %v308 = vld [vmem:[%s307] sm:$0xff]
    %v309 = vld [vmem:[%s307 + $0x8] sm:$0xff]
    %v310 = vld [vmem:[%s307 + $0x10] sm:$0xff]
    %v311 = vld [vmem:[%s307 + $0x18] sm:$0xff]
    %312 = vmatpush.msra.mxu0 %v149
    %313 = vmatpush.msra.mxu0 %v145
    %314 = vmatpush.msra.mxu0 %v141
    %315 = vmatpush.msra.mxu0 %v137
    %316 = vmatpush.msra.mxu0 %v133
    %317 = vmatpush.msra.mxu0 %v129
    %318 = vmatpush.msra.mxu0 %v125
    %319 = vmatpush.msra.mxu0 %v121
    %320 = vmatpush.msra.mxu0 %v117
    %321 = vmatpush.msra.mxu0 %v113
    %322 = vmatpush.msra.mxu0 %v109
    %323 = vmatpush.msra.mxu0 %v105
    %324 = vmatpush.msra.mxu0 %v101
    %325 = vmatpush.msra.mxu0 %v97
    %326 = vmatpush.msra.mxu0 %v93
    %327 = vmatpush.msra.mxu0 %v89
    %328 = vmatmul.f32.gmra.mxu0 %v305
    %v329 = vpop.f32.mrf.mxu0
    %v330 = vadd.f32 0.0, %v329
    %331 = vdwg.mxu0
    %332 = vmatpush.msra.mxu0 %v150
    %333 = vmatpush.msra.mxu0 %v146
    %334 = vmatpush.msra.mxu0 %v142
    %335 = vmatpush.msra.mxu0 %v138
    %336 = vmatpush.msra.mxu0 %v134
    %337 = vmatpush.msra.mxu0 %v130
    %338 = vmatpush.msra.mxu0 %v126
    %339 = vmatpush.msra.mxu0 %v122
    %340 = vmatpush.msra.mxu0 %v118
    %341 = vmatpush.msra.mxu0 %v114
    %342 = vmatpush.msra.mxu0 %v110
    %343 = vmatpush.msra.mxu0 %v106
    %344 = vmatpush.msra.mxu0 %v102
    %345 = vmatpush.msra.mxu0 %v98
    %346 = vmatpush.msra.mxu0 %v94
    %347 = vmatpush.msra.mxu0 %v90
    %348 = vmatmul.f32.gmra.mxu0 %v305
    %v349 = vpop.f32.mrf.mxu0
    %v350 = vadd.f32 0.0, %v349
    %351 = vdwg.mxu0
    %352 = vmatpush.msra.mxu0 %v151
    %353 = vmatpush.msra.mxu0 %v147
    %354 = vmatpush.msra.mxu0 %v143
    %355 = vmatpush.msra.mxu0 %v139
    %356 = vmatpush.msra.mxu0 %v135
    %357 = vmatpush.msra.mxu0 %v131
    %358 = vmatpush.msra.mxu0 %v127
    %359 = vmatpush.msra.mxu0 %v123
    %360 = vmatpush.msra.mxu0 %v119
    %361 = vmatpush.msra.mxu0 %v115
    %362 = vmatpush.msra.mxu0 %v111
    %363 = vmatpush.msra.mxu0 %v107
    %364 = vmatpush.msra.mxu0 %v103
    %365 = vmatpush.msra.mxu0 %v99
    %366 = vmatpush.msra.mxu0 %v95
    %367 = vmatpush.msra.mxu0 %v91
    %368 = vmatmul.f32.gmra.mxu0 %v305
    %v369 = vpop.f32.mrf.mxu0
    %v370 = vadd.f32 0.0, %v369
    %371 = vdwg.mxu0
    %372 = vmatpush.msra.mxu0 %v152
    %373 = vmatpush.msra.mxu0 %v148
    %374 = vmatpush.msra.mxu0 %v144
    %375 = vmatpush.msra.mxu0 %v140
    %376 = vmatpush.msra.mxu0 %v136
    %377 = vmatpush.msra.mxu0 %v132
    %378 = vmatpush.msra.mxu0 %v128
    %379 = vmatpush.msra.mxu0 %v124
    %380 = vmatpush.msra.mxu0 %v120
    %381 = vmatpush.msra.mxu0 %v116
    %382 = vmatpush.msra.mxu0 %v112
    %383 = vmatpush.msra.mxu0 %v108
    %384 = vmatpush.msra.mxu0 %v104
    %385 = vmatpush.msra.mxu0 %v100
    %386 = vmatpush.msra.mxu0 %v96
    %387 = vmatpush.msra.mxu0 %v92
    %388 = vmatmul.f32.gmra.mxu0 %v305
    %v389 = vpop.f32.mrf.mxu0
    %v390 = vadd.f32 0.0, %v389
    %391 = vdwg.mxu0
    %v392 = vadd.f32 %v308, %v330
    %v393 = vadd.f32 %v309, %v350
    %v394 = vadd.f32 %v310, %v370
    %v395 = vadd.f32 %v311, %v390
    %v396 = vxor.u32 %v392, 2147483648
    %v397 = vmul.f32 %v396, 1.442695
    %v398 = vpow.pop %v397
    %v399 = vadd.f32 %v398, 1.0
    %v400 = vrcp.pop %v399
    %v401 = vmul.f32 %v399, %v400
    %v402 = vsub.f32 1.0, %v401
    %v403 = vmul.f32 %v400, %v402
    %v404 = vadd.f32 %v400, %v403
    %vm405 = vweird.f32 %v399
    %vm406 = vweird.f32 %v400
    %vm407 = vmor %vm405, %vm406
    %v408 = vsel %vm407, %v400, %v404
    %v409 = vand.u32 2147483647, %v399
    %vm410 = vcmp.eq.f32.partialorder %v409, 8.507059e+37
    %v411 = vand.u32 %v399, 2147483648
    %v412 = vor.u32 1.1754944e-38, %v411
    %v413 = vsel %vm410, %v412, %v408
    %v414 = vmul.f32 1.0, %v413
    %v415 = vxor.u32 %v393, 2147483648
    %v416 = vmul.f32 %v415, 1.442695
    %v417 = vpow.pop %v416
    %v418 = vadd.f32 %v417, 1.0
    %v419 = vrcp.pop %v418
    %v420 = vmul.f32 %v418, %v419
    %v421 = vsub.f32 1.0, %v420
    %v422 = vmul.f32 %v419, %v421
    %v423 = vadd.f32 %v419, %v422
    %vm424 = vweird.f32 %v418
    %vm425 = vweird.f32 %v419
    %vm426 = vmor %vm424, %vm425
    %v427 = vsel %vm426, %v419, %v423
    %v428 = vand.u32 2147483647, %v418
    %vm429 = vcmp.eq.f32.partialorder %v428, 8.507059e+37
    %v430 = vand.u32 %v418, 2147483648
    %v431 = vor.u32 1.1754944e-38, %v430
    %v432 = vsel %vm429, %v431, %v427
    %v433 = vmul.f32 1.0, %v432
    %v434 = vxor.u32 %v394, 2147483648
    %v435 = vmul.f32 %v434, 1.442695
    %v436 = vpow.pop %v435
    %v437 = vadd.f32 %v436, 1.0
    %v438 = vrcp.pop %v437
    %v439 = vmul.f32 %v437, %v438
    %v440 = vsub.f32 1.0, %v439
    %v441 = vmul.f32 %v438, %v440
    %v442 = vadd.f32 %v438, %v441
    %vm443 = vweird.f32 %v437
    %vm444 = vweird.f32 %v438
    %vm445 = vmor %vm443, %vm444
    %v446 = vsel %vm445, %v438, %v442
    %v447 = vand.u32 2147483647, %v437
    %vm448 = vcmp.eq.f32.partialorder %v447, 8.507059e+37
    %v449 = vand.u32 %v437, 2147483648
    %v450 = vor.u32 1.1754944e-38, %v449
    %v451 = vsel %vm448, %v450, %v446
    %v452 = vmul.f32 1.0, %v451
    %v453 = vtanh.pop %v395
    %v454 = vmul.f32 %v433, %v303
    %v455 = vmul.f32 %v414, %v453
    %v456 = vadd.f32 %v454, %v455
    %v457 = vtanh.pop %v456
    %v458 = vmul.f32 %v452, %v457
    %s459 = scalar_lea.vmem [#allocation10], 8
    %460 = vst [vmem:[%s459] sm:$0xff] %v458
    %s461 = scalar_lea.vmem [#allocation2], 64
    %v462 = vld [vmem:[%s461] sm:$0xff]
    %v463 = vld [vmem:[%s461 + $0x8] sm:$0xff]
    %v464 = vld [vmem:[%s461 + $0x10] sm:$0xff]
    %v465 = vld [vmem:[%s461 + $0x18] sm:$0xff]
    %466 = vmatpush.msra.mxu0 %v149
    %467 = vmatpush.msra.mxu0 %v145
    %468 = vmatpush.msra.mxu0 %v141
    %469 = vmatpush.msra.mxu0 %v137
    %470 = vmatpush.msra.mxu0 %v133
    %471 = vmatpush.msra.mxu0 %v129
    %472 = vmatpush.msra.mxu0 %v125
    %473 = vmatpush.msra.mxu0 %v121
    %474 = vmatpush.msra.mxu0 %v117
    %475 = vmatpush.msra.mxu0 %v113
    %476 = vmatpush.msra.mxu0 %v109
    %477 = vmatpush.msra.mxu0 %v105
    %478 = vmatpush.msra.mxu0 %v101
    %479 = vmatpush.msra.mxu0 %v97
    %480 = vmatpush.msra.mxu0 %v93
    %481 = vmatpush.msra.mxu0 %v89
    %482 = vmatmul.f32.gmra.mxu0 %v458
    %v483 = vpop.f32.mrf.mxu0
    %v484 = vadd.f32 0.0, %v483
    %485 = vdwg.mxu0
    %486 = vmatpush.msra.mxu0 %v150
    %487 = vmatpush.msra.mxu0 %v146
    %488 = vmatpush.msra.mxu0 %v142
    %489 = vmatpush.msra.mxu0 %v138
    %490 = vmatpush.msra.mxu0 %v134
    %491 = vmatpush.msra.mxu0 %v130
    %492 = vmatpush.msra.mxu0 %v126
    %493 = vmatpush.msra.mxu0 %v122
    %494 = vmatpush.msra.mxu0 %v118
    %495 = vmatpush.msra.mxu0 %v114
    %496 = vmatpush.msra.mxu0 %v110
    %497 = vmatpush.msra.mxu0 %v106
    %498 = vmatpush.msra.mxu0 %v102
    %499 = vmatpush.msra.mxu0 %v98
    %500 = vmatpush.msra.mxu0 %v94
    %501 = vmatpush.msra.mxu0 %v90
    %502 = vmatmul.f32.gmra.mxu0 %v458
    %v503 = vpop.f32.mrf.mxu0
    %v504 = vadd.f32 0.0, %v503
    %505 = vdwg.mxu0
    %506 = vmatpush.msra.mxu0 %v151
    %507 = vmatpush.msra.mxu0 %v147
    %508 = vmatpush.msra.mxu0 %v143
    %509 = vmatpush.msra.mxu0 %v139
    %510 = vmatpush.msra.mxu0 %v135
    %511 = vmatpush.msra.mxu0 %v131
    %512 = vmatpush.msra.mxu0 %v127
    %513 = vmatpush.msra.mxu0 %v123
    %514 = vmatpush.msra.mxu0 %v119
    %515 = vmatpush.msra.mxu0 %v115
    %516 = vmatpush.msra.mxu0 %v111
    %517 = vmatpush.msra.mxu0 %v107
    %518 = vmatpush.msra.mxu0 %v103
    %519 = vmatpush.msra.mxu0 %v99
    %520 = vmatpush.msra.mxu0 %v95
    %521 = vmatpush.msra.mxu0 %v91
    %522 = vmatmul.f32.gmra.mxu0 %v458
    %v523 = vpop.f32.mrf.mxu0
    %v524 = vadd.f32 0.0, %v523
    %525 = vdwg.mxu0
    %526 = vmatpush.msra.mxu0 %v152
    %527 = vmatpush.msra.mxu0 %v148
    %528 = vmatpush.msra.mxu0 %v144
    %529 = vmatpush.msra.mxu0 %v140
    %530 = vmatpush.msra.mxu0 %v136
    %531 = vmatpush.msra.mxu0 %v132
    %532 = vmatpush.msra.mxu0 %v128
    %533 = vmatpush.msra.mxu0 %v124
    %534 = vmatpush.msra.mxu0 %v120
    %535 = vmatpush.msra.mxu0 %v116
    %536 = vmatpush.msra.mxu0 %v112
    %537 = vmatpush.msra.mxu0 %v108
    %538 = vmatpush.msra.mxu0 %v104
    %539 = vmatpush.msra.mxu0 %v100
    %540 = vmatpush.msra.mxu0 %v96
    %541 = vmatpush.msra.mxu0 %v92
    %542 = vmatmul.f32.gmra.mxu0 %v458
    %v543 = vpop.f32.mrf.mxu0
    %v544 = vadd.f32 0.0, %v543
    %545 = vdwg.mxu0
    %v546 = vadd.f32 %v462, %v484
    %v547 = vadd.f32 %v463, %v504
    %v548 = vadd.f32 %v464, %v524
    %v549 = vadd.f32 %v465, %v544
    %v550 = vxor.u32 %v546, 2147483648
    %v551 = vmul.f32 %v550, 1.442695
    %v552 = vpow.pop %v551
    %v553 = vadd.f32 %v552, 1.0
    %v554 = vrcp.pop %v553
    %v555 = vmul.f32 %v553, %v554
    %v556 = vsub.f32 1.0, %v555
    %v557 = vmul.f32 %v554, %v556
    %v558 = vadd.f32 %v554, %v557
    %vm559 = vweird.f32 %v553
    %vm560 = vweird.f32 %v554
    %vm561 = vmor %vm559, %vm560
    %v562 = vsel %vm561, %v554, %v558
    %v563 = vand.u32 2147483647, %v553
    %vm564 = vcmp.eq.f32.partialorder %v563, 8.507059e+37
    %v565 = vand.u32 %v553, 2147483648
    %v566 = vor.u32 1.1754944e-38, %v565
    %v567 = vsel %vm564, %v566, %v562
    %v568 = vmul.f32 1.0, %v567
    %v569 = vxor.u32 %v547, 2147483648
    %v570 = vmul.f32 %v569, 1.442695
    %v571 = vpow.pop %v570
    %v572 = vadd.f32 %v571, 1.0
    %v573 = vrcp.pop %v572
    %v574 = vmul.f32 %v572, %v573
    %v575 = vsub.f32 1.0, %v574
    %v576 = vmul.f32 %v573, %v575
    %v577 = vadd.f32 %v573, %v576
    %vm578 = vweird.f32 %v572
    %vm579 = vweird.f32 %v573
    %vm580 = vmor %vm578, %vm579
    %v581 = vsel %vm580, %v573, %v577
    %v582 = vand.u32 2147483647, %v572
    %vm583 = vcmp.eq.f32.partialorder %v582, 8.507059e+37
    %v584 = vand.u32 %v572, 2147483648
    %v585 = vor.u32 1.1754944e-38, %v584
    %v586 = vsel %vm583, %v585, %v581
    %v587 = vmul.f32 1.0, %v586
    %v588 = vxor.u32 %v548, 2147483648
    %v589 = vmul.f32 %v588, 1.442695
    %v590 = vpow.pop %v589
    %v591 = vadd.f32 %v590, 1.0
    %v592 = vrcp.pop %v591
    %v593 = vmul.f32 %v591, %v592
    %v594 = vsub.f32 1.0, %v593
    %v595 = vmul.f32 %v592, %v594
    %v596 = vadd.f32 %v592, %v595
    %vm597 = vweird.f32 %v591
    %vm598 = vweird.f32 %v592
    %vm599 = vmor %vm597, %vm598
    %v600 = vsel %vm599, %v592, %v596
    %v601 = vand.u32 2147483647, %v591
    %vm602 = vcmp.eq.f32.partialorder %v601, 8.507059e+37
    %v603 = vand.u32 %v591, 2147483648
    %v604 = vor.u32 1.1754944e-38, %v603
    %v605 = vsel %vm602, %v604, %v600
    %v606 = vmul.f32 1.0, %v605
    %v607 = vtanh.pop %v549
    %v608 = vmul.f32 %v587, %v456
    %v609 = vmul.f32 %v568, %v607
    %v610 = vadd.f32 %v608, %v609
    %v611 = vtanh.pop %v610
    %v612 = vmul.f32 %v606, %v611
    %s613 = scalar_lea.vmem [#allocation10], 16
    %614 = vst [vmem:[%s613] sm:$0xff] %v612
    %s615 = scalar_lea.vmem [#allocation2], 96
    %v616 = vld [vmem:[%s615] sm:$0xff]
    %v617 = vld [vmem:[%s615 + $0x8] sm:$0xff]
    %v618 = vld [vmem:[%s615 + $0x10] sm:$0xff]
    %v619 = vld [vmem:[%s615 + $0x18] sm:$0xff]
    %620 = vmatpush.msra.mxu0 %v149
    %621 = vmatpush.msra.mxu0 %v145
    %622 = vmatpush.msra.mxu0 %v141
    %623 = vmatpush.msra.mxu0 %v137
    %624 = vmatpush.msra.mxu0 %v133
    %625 = vmatpush.msra.mxu0 %v129
    %626 = vmatpush.msra.mxu0 %v125
    %627 = vmatpush.msra.mxu0 %v121
    %628 = vmatpush.msra.mxu0 %v117
    %629 = vmatpush.msra.mxu0 %v113
    %630 = vmatpush.msra.mxu0 %v109
    %631 = vmatpush.msra.mxu0 %v105
    %632 = vmatpush.msra.mxu0 %v101
    %633 = vmatpush.msra.mxu0 %v97
    %634 = vmatpush.msra.mxu0 %v93
    %635 = vmatpush.msra.mxu0 %v89
    %636 = vmatmul.f32.gmra.mxu0 %v612
    %v637 = vpop.f32.mrf.mxu0
    %v638 = vadd.f32 0.0, %v637
    %639 = vdwg.mxu0
    %640 = vmatpush.msra.mxu0 %v150
    %641 = vmatpush.msra.mxu0 %v146
    %642 = vmatpush.msra.mxu0 %v142
    %643 = vmatpush.msra.mxu0 %v138
    %644 = vmatpush.msra.mxu0 %v134
    %645 = vmatpush.msra.mxu0 %v130
    %646 = vmatpush.msra.mxu0 %v126
    %647 = vmatpush.msra.mxu0 %v122
    %648 = vmatpush.msra.mxu0 %v118
    %649 = vmatpush.msra.mxu0 %v114
    %650 = vmatpush.msra.mxu0 %v110
    %651 = vmatpush.msra.mxu0 %v106
    %652 = vmatpush.msra.mxu0 %v102
    %653 = vmatpush.msra.mxu0 %v98
    %654 = vmatpush.msra.mxu0 %v94
    %655 = vmatpush.msra.mxu0 %v90
    %656 = vmatmul.f32.gmra.mxu0 %v612
    %v657 = vpop.f32.mrf.mxu0
    %v658 = vadd.f32 0.0, %v657
    %659 = vdwg.mxu0
    %660 = vmatpush.msra.mxu0 %v151
    %661 = vmatpush.msra.mxu0 %v147
    %662 = vmatpush.msra.mxu0 %v143
    %663 = vmatpush.msra.mxu0 %v139
    %664 = vmatpush.msra.mxu0 %v135
    %665 = vmatpush.msra.mxu0 %v131
    %666 = vmatpush.msra.mxu0 %v127
    %667 = vmatpush.msra.mxu0 %v123
    %668 = vmatpush.msra.mxu0 %v119
    %669 = vmatpush.msra.mxu0 %v115
    %670 = vmatpush.msra.mxu0 %v111
    %671 = vmatpush.msra.mxu0 %v107
    %672 = vmatpush.msra.mxu0 %v103
    %673 = vmatpush.msra.mxu0 %v99
    %674 = vmatpush.msra.mxu0 %v95
    %675 = vmatpush.msra.mxu0 %v91
    %676 = vmatmul.f32.gmra.mxu0 %v612
    %v677 = vpop.f32.mrf.mxu0
    %v678 = vadd.f32 0.0, %v677
    %679 = vdwg.mxu0
    %680 = vmatpush.msra.mxu0 %v152
    %681 = vmatpush.msra.mxu0 %v148
    %682 = vmatpush.msra.mxu0 %v144
    %683 = vmatpush.msra.mxu0 %v140
    %684 = vmatpush.msra.mxu0 %v136
    %685 = vmatpush.msra.mxu0 %v132
    %686 = vmatpush.msra.mxu0 %v128
    %687 = vmatpush.msra.mxu0 %v124
    %688 = vmatpush.msra.mxu0 %v120
    %689 = vmatpush.msra.mxu0 %v116
    %690 = vmatpush.msra.mxu0 %v112
    %691 = vmatpush.msra.mxu0 %v108
    %692 = vmatpush.msra.mxu0 %v104
    %693 = vmatpush.msra.mxu0 %v100
    %694 = vmatpush.msra.mxu0 %v96
    %695 = vmatpush.msra.mxu0 %v92
    %696 = vmatmul.f32.gmra.mxu0 %v612
    %v697 = vpop.f32.mrf.mxu0
    %v698 = vadd.f32 0.0, %v697
    %699 = vdwg.mxu0
    %v700 = vadd.f32 %v616, %v638
    %v701 = vadd.f32 %v617, %v658
    %v702 = vadd.f32 %v618, %v678
    %v703 = vadd.f32 %v619, %v698
    %v704 = vxor.u32 %v700, 2147483648
    %v705 = vmul.f32 %v704, 1.442695
    %v706 = vpow.pop %v705
    %v707 = vadd.f32 %v706, 1.0
    %v708 = vrcp.pop %v707
    %v709 = vmul.f32 %v707, %v708
    %v710 = vsub.f32 1.0, %v709
    %v711 = vmul.f32 %v708, %v710
    %v712 = vadd.f32 %v708, %v711
    %vm713 = vweird.f32 %v707
    %vm714 = vweird.f32 %v708
    %vm715 = vmor %vm713, %vm714
    %v716 = vsel %vm715, %v708, %v712
    %v717 = vand.u32 2147483647, %v707
    %vm718 = vcmp.eq.f32.partialorder %v717, 8.507059e+37
    %v719 = vand.u32 %v707, 2147483648
    %v720 = vor.u32 1.1754944e-38, %v719
    %v721 = vsel %vm718, %v720, %v716
    %v722 = vmul.f32 1.0, %v721
    %v723 = vxor.u32 %v701, 2147483648
    %v724 = vmul.f32 %v723, 1.442695
    %v725 = vpow.pop %v724
    %v726 = vadd.f32 %v725, 1.0
    %v727 = vrcp.pop %v726
    %v728 = vmul.f32 %v726, %v727
    %v729 = vsub.f32 1.0, %v728
    %v730 = vmul.f32 %v727, %v729
    %v731 = vadd.f32 %v727, %v730
    %vm732 = vweird.f32 %v726
    %vm733 = vweird.f32 %v727
    %vm734 = vmor %vm732, %vm733
    %v735 = vsel %vm734, %v727, %v731
    %v736 = vand.u32 2147483647, %v726
    %vm737 = vcmp.eq.f32.partialorder %v736, 8.507059e+37
    %v738 = vand.u32 %v726, 2147483648
    %v739 = vor.u32 1.1754944e-38, %v738
    %v740 = vsel %vm737, %v739, %v735
    %v741 = vmul.f32 1.0, %v740
    %v742 = vxor.u32 %v702, 2147483648
    %v743 = vmul.f32 %v742, 1.442695
    %v744 = vpow.pop %v743
    %v745 = vadd.f32 %v744, 1.0
    %v746 = vrcp.pop %v745
    %v747 = vmul.f32 %v745, %v746
    %v748 = vsub.f32 1.0, %v747
    %v749 = vmul.f32 %v746, %v748
    %v750 = vadd.f32 %v746, %v749
    %vm751 = vweird.f32 %v745
    %vm752 = vweird.f32 %v746
    %vm753 = vmor %vm751, %vm752
    %v754 = vsel %vm753, %v746, %v750
    %v755 = vand.u32 2147483647, %v745
    %vm756 = vcmp.eq.f32.partialorder %v755, 8.507059e+37
    %v757 = vand.u32 %v745, 2147483648
    %v758 = vor.u32 1.1754944e-38, %v757
    %v759 = vsel %vm756, %v758, %v754
    %v760 = vmul.f32 1.0, %v759
    %v761 = vtanh.pop %v703
    %v762 = vmul.f32 %v741, %v610
    %v763 = vmul.f32 %v722, %v761
    %v764 = vadd.f32 %v762, %v763
    %v765 = vtanh.pop %v764
    %v766 = vmul.f32 %v760, %v765
    %s767 = scalar_lea.vmem [#allocation10], 24
    %768 = vst [vmem:[%s767] sm:$0xff] %v766
    %s769 = scalar_lea.vmem [#allocation2], 128
    %v770 = vld [vmem:[%s769] sm:$0xff]
    %v771 = vld [vmem:[%s769 + $0x8] sm:$0xff]
    %v772 = vld [vmem:[%s769 + $0x10] sm:$0xff]
    %v773 = vld [vmem:[%s769 + $0x18] sm:$0xff]
    %774 = vmatpush.msra.mxu0 %v149
    %775 = vmatpush.msra.mxu0 %v145
    %776 = vmatpush.msra.mxu0 %v141
    %777 = vmatpush.msra.mxu0 %v137
    %778 = vmatpush.msra.mxu0 %v133
    %779 = vmatpush.msra.mxu0 %v129
    %780 = vmatpush.msra.mxu0 %v125
    %781 = vmatpush.msra.mxu0 %v121
    %782 = vmatpush.msra.mxu0 %v117
    %783 = vmatpush.msra.mxu0 %v113
    %784 = vmatpush.msra.mxu0 %v109
    %785 = vmatpush.msra.mxu0 %v105
    %786 = vmatpush.msra.mxu0 %v101
    %787 = vmatpush.msra.mxu0 %v97
    %788 = vmatpush.msra.mxu0 %v93
    %789 = vmatpush.msra.mxu0 %v89
    %790 = vmatmul.f32.gmra.mxu0 %v766
    %v791 = vpop.f32.mrf.mxu0
    %v792 = vadd.f32 0.0, %v791
    %793 = vdwg.mxu0
    %794 = vmatpush.msra.mxu0 %v150
    %795 = vmatpush.msra.mxu0 %v146
    %796 = vmatpush.msra.mxu0 %v142
    %797 = vmatpush.msra.mxu0 %v138
    %798 = vmatpush.msra.mxu0 %v134
    %799 = vmatpush.msra.mxu0 %v130
    %800 = vmatpush.msra.mxu0 %v126
    %801 = vmatpush.msra.mxu0 %v122
    %802 = vmatpush.msra.mxu0 %v118
    %803 = vmatpush.msra.mxu0 %v114
    %804 = vmatpush.msra.mxu0 %v110
    %805 = vmatpush.msra.mxu0 %v106
    %806 = vmatpush.msra.mxu0 %v102
    %807 = vmatpush.msra.mxu0 %v98
    %808 = vmatpush.msra.mxu0 %v94
    %809 = vmatpush.msra.mxu0 %v90
    %810 = vmatmul.f32.gmra.mxu0 %v766
    %v811 = vpop.f32.mrf.mxu0
    %v812 = vadd.f32 0.0, %v811
    %813 = vdwg.mxu0
    %814 = vmatpush.msra.mxu0 %v151
    %815 = vmatpush.msra.mxu0 %v147
    %816 = vmatpush.msra.mxu0 %v143
    %817 = vmatpush.msra.mxu0 %v139
    %818 = vmatpush.msra.mxu0 %v135
    %819 = vmatpush.msra.mxu0 %v131
    %820 = vmatpush.msra.mxu0 %v127
    %821 = vmatpush.msra.mxu0 %v123
    %822 = vmatpush.msra.mxu0 %v119
    %823 = vmatpush.msra.mxu0 %v115
    %824 = vmatpush.msra.mxu0 %v111
    %825 = vmatpush.msra.mxu0 %v107
    %826 = vmatpush.msra.mxu0 %v103
    %827 = vmatpush.msra.mxu0 %v99
    %828 = vmatpush.msra.mxu0 %v95
    %829 = vmatpush.msra.mxu0 %v91
    %830 = vmatmul.f32.gmra.mxu0 %v766
    %v831 = vpop.f32.mrf.mxu0
    %v832 = vadd.f32 0.0, %v831
    %833 = vdwg.mxu0
    %834 = vmatpush.msra.mxu0 %v152
    %835 = vmatpush.msra.mxu0 %v148
    %836 = vmatpush.msra.mxu0 %v144
    %837 = vmatpush.msra.mxu0 %v140
    %838 = vmatpush.msra.mxu0 %v136
    %839 = vmatpush.msra.mxu0 %v132
    %840 = vmatpush.msra.mxu0 %v128
    %841 = vmatpush.msra.mxu0 %v124
    %842 = vmatpush.msra.mxu0 %v120
    %843 = vmatpush.msra.mxu0 %v116
    %844 = vmatpush.msra.mxu0 %v112
    %845 = vmatpush.msra.mxu0 %v108
    %846 = vmatpush.msra.mxu0 %v104
    %847 = vmatpush.msra.mxu0 %v100
    %848 = vmatpush.msra.mxu0 %v96
    %849 = vmatpush.msra.mxu0 %v92
    %850 = vmatmul.f32.gmra.mxu0 %v766
    %v851 = vpop.f32.mrf.mxu0
    %v852 = vadd.f32 0.0, %v851
    %853 = vdwg.mxu0
    %v854 = vadd.f32 %v770, %v792
    %v855 = vadd.f32 %v771, %v812
    %v856 = vadd.f32 %v772, %v832
    %v857 = vadd.f32 %v773, %v852
    %v858 = vxor.u32 %v854, 2147483648
    %v859 = vmul.f32 %v858, 1.442695
    %v860 = vpow.pop %v859
    %v861 = vadd.f32 %v860, 1.0
    %v862 = vrcp.pop %v861
    %v863 = vmul.f32 %v861, %v862
    %v864 = vsub.f32 1.0, %v863
    %v865 = vmul.f32 %v862, %v864
    %v866 = vadd.f32 %v862, %v865
    %vm867 = vweird.f32 %v861
    %vm868 = vweird.f32 %v862
    %vm869 = vmor %vm867, %vm868
    %v870 = vsel %vm869, %v862, %v866
    %v871 = vand.u32 2147483647, %v861
    %vm872 = vcmp.eq.f32.partialorder %v871, 8.507059e+37
    %v873 = vand.u32 %v861, 2147483648
    %v874 = vor.u32 1.1754944e-38, %v873
    %v875 = vsel %vm872, %v874, %v870
    %v876 = vmul.f32 1.0, %v875
    %v877 = vxor.u32 %v855, 2147483648
    %v878 = vmul.f32 %v877, 1.442695
    %v879 = vpow.pop %v878
    %v880 = vadd.f32 %v879, 1.0
    %v881 = vrcp.pop %v880
    %v882 = vmul.f32 %v880, %v881
    %v883 = vsub.f32 1.0, %v882
    %v884 = vmul.f32 %v881, %v883
    %v885 = vadd.f32 %v881, %v884
    %vm886 = vweird.f32 %v880
    %vm887 = vweird.f32 %v881
    %vm888 = vmor %vm886, %vm887
    %v889 = vsel %vm888, %v881, %v885
    %v890 = vand.u32 2147483647, %v880
    %vm891 = vcmp.eq.f32.partialorder %v890, 8.507059e+37
    %v892 = vand.u32 %v880, 2147483648
    %v893 = vor.u32 1.1754944e-38, %v892
    %v894 = vsel %vm891, %v893, %v889
    %v895 = vmul.f32 1.0, %v894
    %v896 = vxor.u32 %v856, 2147483648
    %v897 = vmul.f32 %v896, 1.442695
    %v898 = vpow.pop %v897
    %v899 = vadd.f32 %v898, 1.0
    %v900 = vrcp.pop %v899
    %v901 = vmul.f32 %v899, %v900
    %v902 = vsub.f32 1.0, %v901
    %v903 = vmul.f32 %v900, %v902
    %v904 = vadd.f32 %v900, %v903
    %vm905 = vweird.f32 %v899
    %vm906 = vweird.f32 %v900
    %vm907 = vmor %vm905, %vm906
    %v908 = vsel %vm907, %v900, %v904
    %v909 = vand.u32 2147483647, %v899
    %vm910 = vcmp.eq.f32.partialorder %v909, 8.507059e+37
    %v911 = vand.u32 %v899, 2147483648
    %v912 = vor.u32 1.1754944e-38, %v911
    %v913 = vsel %vm910, %v912, %v908
    %v914 = vmul.f32 1.0, %v913
    %v915 = vtanh.pop %v857
    %v916 = vmul.f32 %v895, %v764
    %v917 = vmul.f32 %v876, %v915
    %v918 = vadd.f32 %v916, %v917
    %v919 = vtanh.pop %v918
    %v920 = vmul.f32 %v914, %v919
    %s921 = scalar_lea.vmem [#allocation10], 32
    %922 = vst [vmem:[%s921] sm:$0xff] %v920
    %s923 = scalar_lea.vmem [#allocation2], 160
    %v924 = vld [vmem:[%s923] sm:$0xff]
    %v925 = vld [vmem:[%s923 + $0x8] sm:$0xff]
    %v926 = vld [vmem:[%s923 + $0x10] sm:$0xff]
    %v927 = vld [vmem:[%s923 + $0x18] sm:$0xff]
    %928 = vmatpush.msra.mxu0 %v149
    %929 = vmatpush.msra.mxu0 %v145
    %930 = vmatpush.msra.mxu0 %v141
    %931 = vmatpush.msra.mxu0 %v137
    %932 = vmatpush.msra.mxu0 %v133
    %933 = vmatpush.msra.mxu0 %v129
    %934 = vmatpush.msra.mxu0 %v125
    %935 = vmatpush.msra.mxu0 %v121
    %936 = vmatpush.msra.mxu0 %v117
    %937 = vmatpush.msra.mxu0 %v113
    %938 = vmatpush.msra.mxu0 %v109
    %939 = vmatpush.msra.mxu0 %v105
    %940 = vmatpush.msra.mxu0 %v101
    %941 = vmatpush.msra.mxu0 %v97
    %942 = vmatpush.msra.mxu0 %v93
    %943 = vmatpush.msra.mxu0 %v89
    %944 = vmatmul.f32.gmra.mxu0 %v920
    %v945 = vpop.f32.mrf.mxu0
    %v946 = vadd.f32 0.0, %v945
    %947 = vdwg.mxu0
    %948 = vmatpush.msra.mxu0 %v150
    %949 = vmatpush.msra.mxu0 %v146
    %950 = vmatpush.msra.mxu0 %v142
    %951 = vmatpush.msra.mxu0 %v138
    %952 = vmatpush.msra.mxu0 %v134
    %953 = vmatpush.msra.mxu0 %v130
    %954 = vmatpush.msra.mxu0 %v126
    %955 = vmatpush.msra.mxu0 %v122
    %956 = vmatpush.msra.mxu0 %v118
    %957 = vmatpush.msra.mxu0 %v114
    %958 = vmatpush.msra.mxu0 %v110
    %959 = vmatpush.msra.mxu0 %v106
    %960 = vmatpush.msra.mxu0 %v102
    %961 = vmatpush.msra.mxu0 %v98
    %962 = vmatpush.msra.mxu0 %v94
    %963 = vmatpush.msra.mxu0 %v90
    %964 = vmatmul.f32.gmra.mxu0 %v920
    %v965 = vpop.f32.mrf.mxu0
    %v966 = vadd.f32 0.0, %v965
    %967 = vdwg.mxu0
    %968 = vmatpush.msra.mxu0 %v151
    %969 = vmatpush.msra.mxu0 %v147
    %970 = vmatpush.msra.mxu0 %v143
    %971 = vmatpush.msra.mxu0 %v139
    %972 = vmatpush.msra.mxu0 %v135
    %973 = vmatpush.msra.mxu0 %v131
    %974 = vmatpush.msra.mxu0 %v127
    %975 = vmatpush.msra.mxu0 %v123
    %976 = vmatpush.msra.mxu0 %v119
    %977 = vmatpush.msra.mxu0 %v115
    %978 = vmatpush.msra.mxu0 %v111
    %979 = vmatpush.msra.mxu0 %v107
    %980 = vmatpush.msra.mxu0 %v103
    %981 = vmatpush.msra.mxu0 %v99
    %982 = vmatpush.msra.mxu0 %v95
    %983 = vmatpush.msra.mxu0 %v91
    %984 = vmatmul.f32.gmra.mxu0 %v920
    %v985 = vpop.f32.mrf.mxu0
    %v986 = vadd.f32 0.0, %v985
    %987 = vdwg.mxu0
    %988 = vmatpush.msra.mxu0 %v152
    %989 = vmatpush.msra.mxu0 %v148
    %990 = vmatpush.msra.mxu0 %v144
    %991 = vmatpush.msra.mxu0 %v140
    %992 = vmatpush.msra.mxu0 %v136
    %993 = vmatpush.msra.mxu0 %v132
    %994 = vmatpush.msra.mxu0 %v128
    %995 = vmatpush.msra.mxu0 %v124
    %996 = vmatpush.msra.mxu0 %v120
    %997 = vmatpush.msra.mxu0 %v116
    %998 = vmatpush.msra.mxu0 %v112
    %999 = vmatpush.msra.mxu0 %v108
    %1000 = vmatpush.msra.mxu0 %v104
    %1001 = vmatpush.msra.mxu0 %v100
    %1002 = vmatpush.msra.mxu0 %v96
    %1003 = vmatpush.msra.mxu0 %v92
    %1004 = vmatmul.f32.gmra.mxu0 %v920
    %v1005 = vpop.f32.mrf.mxu0
    %v1006 = vadd.f32 0.0, %v1005
    %1007 = vdwg.mxu0
    %v1008 = vadd.f32 %v924, %v946
    %v1009 = vadd.f32 %v925, %v966
    %v1010 = vadd.f32 %v926, %v986
    %v1011 = vadd.f32 %v927, %v1006
    %v1012 = vxor.u32 %v1008, 2147483648
    %v1013 = vmul.f32 %v1012, 1.442695
    %v1014 = vpow.pop %v1013
    %v1015 = vadd.f32 %v1014, 1.0
    %v1016 = vrcp.pop %v1015
    %v1017 = vmul.f32 %v1015, %v1016
    %v1018 = vsub.f32 1.0, %v1017
    %v1019 = vmul.f32 %v1016, %v1018
    %v1020 = vadd.f32 %v1016, %v1019
    %vm1021 = vweird.f32 %v1015
    %vm1022 = vweird.f32 %v1016
    %vm1023 = vmor %vm1021, %vm1022
    %v1024 = vsel %vm1023, %v1016, %v1020
    %v1025 = vand.u32 2147483647, %v1015
    %vm1026 = vcmp.eq.f32.partialorder %v1025, 8.507059e+37
    %v1027 = vand.u32 %v1015, 2147483648
    %v1028 = vor.u32 1.1754944e-38, %v1027
    %v1029 = vsel %vm1026, %v1028, %v1024
    %v1030 = vmul.f32 1.0, %v1029
    %v1031 = vxor.u32 %v1009, 2147483648
    %v1032 = vmul.f32 %v1031, 1.442695
    %v1033 = vpow.pop %v1032
    %v1034 = vadd.f32 %v1033, 1.0
    %v1035 = vrcp.pop %v1034
    %v1036 = vmul.f32 %v1034, %v1035
    %v1037 = vsub.f32 1.0, %v1036
    %v1038 = vmul.f32 %v1035, %v1037
    %v1039 = vadd.f32 %v1035, %v1038
    %vm1040 = vweird.f32 %v1034
    %vm1041 = vweird.f32 %v1035
    %vm1042 = vmor %vm1040, %vm1041
    %v1043 = vsel %vm1042, %v1035, %v1039
    %v1044 = vand.u32 2147483647, %v1034
    %vm1045 = vcmp.eq.f32.partialorder %v1044, 8.507059e+37
    %v1046 = vand.u32 %v1034, 2147483648
    %v1047 = vor.u32 1.1754944e-38, %v1046
    %v1048 = vsel %vm1045, %v1047, %v1043
    %v1049 = vmul.f32 1.0, %v1048
    %v1050 = vxor.u32 %v1010, 2147483648
    %v1051 = vmul.f32 %v1050, 1.442695
    %v1052 = vpow.pop %v1051
    %v1053 = vadd.f32 %v1052, 1.0
    %v1054 = vrcp.pop %v1053
    %v1055 = vmul.f32 %v1053, %v1054
    %v1056 = vsub.f32 1.0, %v1055
    %v1057 = vmul.f32 %v1054, %v1056
    %v1058 = vadd.f32 %v1054, %v1057
    %vm1059 = vweird.f32 %v1053
    %vm1060 = vweird.f32 %v1054
    %vm1061 = vmor %vm1059, %vm1060
    %v1062 = vsel %vm1061, %v1054, %v1058
    %v1063 = vand.u32 2147483647, %v1053
    %vm1064 = vcmp.eq.f32.partialorder %v1063, 8.507059e+37
    %v1065 = vand.u32 %v1053, 2147483648
    %v1066 = vor.u32 1.1754944e-38, %v1065
    %v1067 = vsel %vm1064, %v1066, %v1062
    %v1068 = vmul.f32 1.0, %v1067
    %v1069 = vtanh.pop %v1011
    %v1070 = vmul.f32 %v1049, %v918
    %v1071 = vmul.f32 %v1030, %v1069
    %v1072 = vadd.f32 %v1070, %v1071
    %v1073 = vtanh.pop %v1072
    %v1074 = vmul.f32 %v1068, %v1073
    %s1075 = scalar_lea.vmem [#allocation10], 40
    %1076 = vst [vmem:[%s1075] sm:$0xff] %v1074
    %s1077 = scalar_lea.vmem [#allocation2], 192
    %v1078 = vld [vmem:[%s1077] sm:$0xff]
    %v1079 = vld [vmem:[%s1077 + $0x8] sm:$0xff]
    %v1080 = vld [vmem:[%s1077 + $0x10] sm:$0xff]
    %v1081 = vld [vmem:[%s1077 + $0x18] sm:$0xff]
    %1082 = vmatpush.msra.mxu0 %v149
    %1083 = vmatpush.msra.mxu0 %v145
    %1084 = vmatpush.msra.mxu0 %v141
    %1085 = vmatpush.msra.mxu0 %v137
    %1086 = vmatpush.msra.mxu0 %v133
    %1087 = vmatpush.msra.mxu0 %v129
    %1088 = vmatpush.msra.mxu0 %v125
    %1089 = vmatpush.msra.mxu0 %v121
    %1090 = vmatpush.msra.mxu0 %v117
    %1091 = vmatpush.msra.mxu0 %v113
    %1092 = vmatpush.msra.mxu0 %v109
    %1093 = vmatpush.msra.mxu0 %v105
    %1094 = vmatpush.msra.mxu0 %v101
    %1095 = vmatpush.msra.mxu0 %v97
    %1096 = vmatpush.msra.mxu0 %v93
    %1097 = vmatpush.msra.mxu0 %v89
    %1098 = vmatmul.f32.gmra.mxu0 %v1074
    %v1099 = vpop.f32.mrf.mxu0
    %v1100 = vadd.f32 0.0, %v1099
    %1101 = vdwg.mxu0
    %1102 = vmatpush.msra.mxu0 %v150
    %1103 = vmatpush.msra.mxu0 %v146
    %1104 = vmatpush.msra.mxu0 %v142
    %1105 = vmatpush.msra.mxu0 %v138
    %1106 = vmatpush.msra.mxu0 %v134
    %1107 = vmatpush.msra.mxu0 %v130
    %1108 = vmatpush.msra.mxu0 %v126
    %1109 = vmatpush.msra.mxu0 %v122
    %1110 = vmatpush.msra.mxu0 %v118
    %1111 = vmatpush.msra.mxu0 %v114
    %1112 = vmatpush.msra.mxu0 %v110
    %1113 = vmatpush.msra.mxu0 %v106
    %1114 = vmatpush.msra.mxu0 %v102
    %1115 = vmatpush.msra.mxu0 %v98
    %1116 = vmatpush.msra.mxu0 %v94
    %1117 = vmatpush.msra.mxu0 %v90
    %1118 = vmatmul.f32.gmra.mxu0 %v1074
    %v1119 = vpop.f32.mrf.mxu0
    %v1120 = vadd.f32 0.0, %v1119
    %1121 = vdwg.mxu0
    %1122 = vmatpush.msra.mxu0 %v151
    %1123 = vmatpush.msra.mxu0 %v147
    %1124 = vmatpush.msra.mxu0 %v143
    %1125 = vmatpush.msra.mxu0 %v139
    %1126 = vmatpush.msra.mxu0 %v135
    %1127 = vmatpush.msra.mxu0 %v131
    %1128 = vmatpush.msra.mxu0 %v127
    %1129 = vmatpush.msra.mxu0 %v123
    %1130 = vmatpush.msra.mxu0 %v119
    %1131 = vmatpush.msra.mxu0 %v115
    %1132 = vmatpush.msra.mxu0 %v111
    %1133 = vmatpush.msra.mxu0 %v107
    %1134 = vmatpush.msra.mxu0 %v103
    %1135 = vmatpush.msra.mxu0 %v99
    %1136 = vmatpush.msra.mxu0 %v95
    %1137 = vmatpush.msra.mxu0 %v91
    %1138 = vmatmul.f32.gmra.mxu0 %v1074
    %v1139 = vpop.f32.mrf.mxu0
    %v1140 = vadd.f32 0.0, %v1139
    %1141 = vdwg.mxu0
    %1142 = vmatpush.msra.mxu0 %v152
    %1143 = vmatpush.msra.mxu0 %v148
    %1144 = vmatpush.msra.mxu0 %v144
    %1145 = vmatpush.msra.mxu0 %v140
    %1146 = vmatpush.msra.mxu0 %v136
    %1147 = vmatpush.msra.mxu0 %v132
    %1148 = vmatpush.msra.mxu0 %v128
    %1149 = vmatpush.msra.mxu0 %v124
    %1150 = vmatpush.msra.mxu0 %v120
    %1151 = vmatpush.msra.mxu0 %v116
    %1152 = vmatpush.msra.mxu0 %v112
    %1153 = vmatpush.msra.mxu0 %v108
    %1154 = vmatpush.msra.mxu0 %v104
    %1155 = vmatpush.msra.mxu0 %v100
    %1156 = vmatpush.msra.mxu0 %v96
    %1157 = vmatpush.msra.mxu0 %v92
    %1158 = vmatmul.f32.gmra.mxu0 %v1074
    %v1159 = vpop.f32.mrf.mxu0
    %v1160 = vadd.f32 0.0, %v1159
    %1161 = vdwg.mxu0
    %v1162 = vadd.f32 %v1078, %v1100
    %v1163 = vadd.f32 %v1079, %v1120
    %v1164 = vadd.f32 %v1080, %v1140
    %v1165 = vadd.f32 %v1081, %v1160
    %v1166 = vxor.u32 %v1162, 2147483648
    %v1167 = vmul.f32 %v1166, 1.442695
    %v1168 = vpow.pop %v1167
    %v1169 = vadd.f32 %v1168, 1.0
    %v1170 = vrcp.pop %v1169
    %v1171 = vmul.f32 %v1169, %v1170
    %v1172 = vsub.f32 1.0, %v1171
    %v1173 = vmul.f32 %v1170, %v1172
    %v1174 = vadd.f32 %v1170, %v1173
    %vm1175 = vweird.f32 %v1169
    %vm1176 = vweird.f32 %v1170
    %vm1177 = vmor %vm1175, %vm1176
    %v1178 = vsel %vm1177, %v1170, %v1174
    %v1179 = vand.u32 2147483647, %v1169
    %vm1180 = vcmp.eq.f32.partialorder %v1179, 8.507059e+37
    %v1181 = vand.u32 %v1169, 2147483648
    %v1182 = vor.u32 1.1754944e-38, %v1181
    %v1183 = vsel %vm1180, %v1182, %v1178
    %v1184 = vmul.f32 1.0, %v1183
    %v1185 = vxor.u32 %v1163, 2147483648
    %v1186 = vmul.f32 %v1185, 1.442695
    %v1187 = vpow.pop %v1186
    %v1188 = vadd.f32 %v1187, 1.0
    %v1189 = vrcp.pop %v1188
    %v1190 = vmul.f32 %v1188, %v1189
    %v1191 = vsub.f32 1.0, %v1190
    %v1192 = vmul.f32 %v1189, %v1191
    %v1193 = vadd.f32 %v1189, %v1192
    %vm1194 = vweird.f32 %v1188
    %vm1195 = vweird.f32 %v1189
    %vm1196 = vmor %vm1194, %vm1195
    %v1197 = vsel %vm1196, %v1189, %v1193
    %v1198 = vand.u32 2147483647, %v1188
    %vm1199 = vcmp.eq.f32.partialorder %v1198, 8.507059e+37
    %v1200 = vand.u32 %v1188, 2147483648
    %v1201 = vor.u32 1.1754944e-38, %v1200
    %v1202 = vsel %vm1199, %v1201, %v1197
    %v1203 = vmul.f32 1.0, %v1202
    %v1204 = vxor.u32 %v1164, 2147483648
    %v1205 = vmul.f32 %v1204, 1.442695
    %v1206 = vpow.pop %v1205
    %v1207 = vadd.f32 %v1206, 1.0
    %v1208 = vrcp.pop %v1207
    %v1209 = vmul.f32 %v1207, %v1208
    %v1210 = vsub.f32 1.0, %v1209
    %v1211 = vmul.f32 %v1208, %v1210
    %v1212 = vadd.f32 %v1208, %v1211
    %vm1213 = vweird.f32 %v1207
    %vm1214 = vweird.f32 %v1208
    %vm1215 = vmor %vm1213, %vm1214
    %v1216 = vsel %vm1215, %v1208, %v1212
    %v1217 = vand.u32 2147483647, %v1207
    %vm1218 = vcmp.eq.f32.partialorder %v1217, 8.507059e+37
    %v1219 = vand.u32 %v1207, 2147483648
    %v1220 = vor.u32 1.1754944e-38, %v1219
    %v1221 = vsel %vm1218, %v1220, %v1216
    %v1222 = vmul.f32 1.0, %v1221
    %v1223 = vtanh.pop %v1165
    %v1224 = vmul.f32 %v1203, %v1072
    %v1225 = vmul.f32 %v1184, %v1223
    %v1226 = vadd.f32 %v1224, %v1225
    %v1227 = vtanh.pop %v1226
    %v1228 = vmul.f32 %v1222, %v1227
    %s1229 = scalar_lea.vmem [#allocation10], 48
    %1230 = vst [vmem:[%s1229] sm:$0xff] %v1228
    %s1231 = scalar_lea.vmem [#allocation2], 224
    %v1232 = vld [vmem:[%s1231] sm:$0xff]
    %v1233 = vld [vmem:[%s1231 + $0x8] sm:$0xff]
    %v1234 = vld [vmem:[%s1231 + $0x10] sm:$0xff]
    %v1235 = vld [vmem:[%s1231 + $0x18] sm:$0xff]
    %1236 = vmatpush.msra.mxu0 %v149
    %1237 = vmatpush.msra.mxu0 %v145
    %1238 = vmatpush.msra.mxu0 %v141
    %1239 = vmatpush.msra.mxu0 %v137
    %1240 = vmatpush.msra.mxu0 %v133
    %1241 = vmatpush.msra.mxu0 %v129
    %1242 = vmatpush.msra.mxu0 %v125
    %1243 = vmatpush.msra.mxu0 %v121
    %1244 = vmatpush.msra.mxu0 %v117
    %1245 = vmatpush.msra.mxu0 %v113
    %1246 = vmatpush.msra.mxu0 %v109
    %1247 = vmatpush.msra.mxu0 %v105
    %1248 = vmatpush.msra.mxu0 %v101
    %1249 = vmatpush.msra.mxu0 %v97
    %1250 = vmatpush.msra.mxu0 %v93
    %1251 = vmatpush.msra.mxu0 %v89
    %1252 = vmatmul.f32.gmra.mxu0 %v1228
    %v1253 = vpop.f32.mrf.mxu0
    %v1254 = vadd.f32 0.0, %v1253
    %1255 = vdwg.mxu0
    %1256 = vmatpush.msra.mxu0 %v150
    %1257 = vmatpush.msra.mxu0 %v146
    %1258 = vmatpush.msra.mxu0 %v142
    %1259 = vmatpush.msra.mxu0 %v138
    %1260 = vmatpush.msra.mxu0 %v134
    %1261 = vmatpush.msra.mxu0 %v130
    %1262 = vmatpush.msra.mxu0 %v126
    %1263 = vmatpush.msra.mxu0 %v122
    %1264 = vmatpush.msra.mxu0 %v118
    %1265 = vmatpush.msra.mxu0 %v114
    %1266 = vmatpush.msra.mxu0 %v110
    %1267 = vmatpush.msra.mxu0 %v106
    %1268 = vmatpush.msra.mxu0 %v102
    %1269 = vmatpush.msra.mxu0 %v98
    %1270 = vmatpush.msra.mxu0 %v94
    %1271 = vmatpush.msra.mxu0 %v90
    %1272 = vmatmul.f32.gmra.mxu0 %v1228
    %v1273 = vpop.f32.mrf.mxu0
    %v1274 = vadd.f32 0.0, %v1273
    %1275 = vdwg.mxu0
    %1276 = vmatpush.msra.mxu0 %v151
    %1277 = vmatpush.msra.mxu0 %v147
    %1278 = vmatpush.msra.mxu0 %v143
    %1279 = vmatpush.msra.mxu0 %v139
    %1280 = vmatpush.msra.mxu0 %v135
    %1281 = vmatpush.msra.mxu0 %v131
    %1282 = vmatpush.msra.mxu0 %v127
    %1283 = vmatpush.msra.mxu0 %v123
    %1284 = vmatpush.msra.mxu0 %v119
    %1285 = vmatpush.msra.mxu0 %v115
    %1286 = vmatpush.msra.mxu0 %v111
    %1287 = vmatpush.msra.mxu0 %v107
    %1288 = vmatpush.msra.mxu0 %v103
    %1289 = vmatpush.msra.mxu0 %v99
    %1290 = vmatpush.msra.mxu0 %v95
    %1291 = vmatpush.msra.mxu0 %v91
    %1292 = vmatmul.f32.gmra.mxu0 %v1228
    %v1293 = vpop.f32.mrf.mxu0
    %v1294 = vadd.f32 0.0, %v1293
    %1295 = vdwg.mxu0
    %1296 = vmatpush.msra.mxu0 %v152
    %1297 = vmatpush.msra.mxu0 %v148
    %1298 = vmatpush.msra.mxu0 %v144
    %1299 = vmatpush.msra.mxu0 %v140
    %1300 = vmatpush.msra.mxu0 %v136
    %1301 = vmatpush.msra.mxu0 %v132
    %1302 = vmatpush.msra.mxu0 %v128
    %1303 = vmatpush.msra.mxu0 %v124
    %1304 = vmatpush.msra.mxu0 %v120
    %1305 = vmatpush.msra.mxu0 %v116
    %1306 = vmatpush.msra.mxu0 %v112
    %1307 = vmatpush.msra.mxu0 %v108
    %1308 = vmatpush.msra.mxu0 %v104
    %1309 = vmatpush.msra.mxu0 %v100
    %1310 = vmatpush.msra.mxu0 %v96
    %1311 = vmatpush.msra.mxu0 %v92
    %1312 = vmatmul.f32.gmra.mxu0 %v1228
    %v1313 = vpop.f32.mrf.mxu0
    %v1314 = vadd.f32 0.0, %v1313
    %1315 = vdwg.mxu0
    %v1316 = vadd.f32 %v1232, %v1254
    %v1317 = vadd.f32 %v1233, %v1274
    %v1318 = vadd.f32 %v1234, %v1294
    %v1319 = vadd.f32 %v1235, %v1314
    %v1320 = vxor.u32 %v1316, 2147483648
    %v1321 = vmul.f32 %v1320, 1.442695
    %v1322 = vpow.pop %v1321
    %v1323 = vadd.f32 %v1322, 1.0
    %v1324 = vrcp.pop %v1323
    %v1325 = vmul.f32 %v1323, %v1324
    %v1326 = vsub.f32 1.0, %v1325
    %v1327 = vmul.f32 %v1324, %v1326
    %v1328 = vadd.f32 %v1324, %v1327
    %vm1329 = vweird.f32 %v1323
    %vm1330 = vweird.f32 %v1324
    %vm1331 = vmor %vm1329, %vm1330
    %v1332 = vsel %vm1331, %v1324, %v1328
    %v1333 = vand.u32 2147483647, %v1323
    %vm1334 = vcmp.eq.f32.partialorder %v1333, 8.507059e+37
    %v1335 = vand.u32 %v1323, 2147483648
    %v1336 = vor.u32 1.1754944e-38, %v1335
    %v1337 = vsel %vm1334, %v1336, %v1332
    %v1338 = vmul.f32 1.0, %v1337
    %v1339 = vxor.u32 %v1317, 2147483648
    %v1340 = vmul.f32 %v1339, 1.442695
    %v1341 = vpow.pop %v1340
    %v1342 = vadd.f32 %v1341, 1.0
    %v1343 = vrcp.pop %v1342
    %v1344 = vmul.f32 %v1342, %v1343
    %v1345 = vsub.f32 1.0, %v1344
    %v1346 = vmul.f32 %v1343, %v1345
    %v1347 = vadd.f32 %v1343, %v1346
    %vm1348 = vweird.f32 %v1342
    %vm1349 = vweird.f32 %v1343
    %vm1350 = vmor %vm1348, %vm1349
    %v1351 = vsel %vm1350, %v1343, %v1347
    %v1352 = vand.u32 2147483647, %v1342
    %vm1353 = vcmp.eq.f32.partialorder %v1352, 8.507059e+37
    %v1354 = vand.u32 %v1342, 2147483648
    %v1355 = vor.u32 1.1754944e-38, %v1354
    %v1356 = vsel %vm1353, %v1355, %v1351
    %v1357 = vmul.f32 1.0, %v1356
    %v1358 = vxor.u32 %v1318, 2147483648
    %v1359 = vmul.f32 %v1358, 1.442695
    %v1360 = vpow.pop %v1359
    %v1361 = vadd.f32 %v1360, 1.0
    %v1362 = vrcp.pop %v1361
    %v1363 = vmul.f32 %v1361, %v1362
    %v1364 = vsub.f32 1.0, %v1363
    %v1365 = vmul.f32 %v1362, %v1364
    %v1366 = vadd.f32 %v1362, %v1365
    %vm1367 = vweird.f32 %v1361
    %vm1368 = vweird.f32 %v1362
    %vm1369 = vmor %vm1367, %vm1368
    %v1370 = vsel %vm1369, %v1362, %v1366
    %v1371 = vand.u32 2147483647, %v1361
    %vm1372 = vcmp.eq.f32.partialorder %v1371, 8.507059e+37
    %v1373 = vand.u32 %v1361, 2147483648
    %v1374 = vor.u32 1.1754944e-38, %v1373
    %v1375 = vsel %vm1372, %v1374, %v1370
    %v1376 = vmul.f32 1.0, %v1375
    %v1377 = vtanh.pop %v1319
    %v1378 = vmul.f32 %v1357, %v1226
    %v1379 = vmul.f32 %v1338, %v1377
    %v1380 = vadd.f32 %v1378, %v1379
    %v1381 = vtanh.pop %v1380
    %v1382 = vmul.f32 %v1376, %v1381
    %s1383 = scalar_lea.vmem [#allocation10], 56
    %1384 = vst [vmem:[%s1383] sm:$0xff] %v1382
    %1385 = vst [vmem:[#allocation11] sm:$0xff] %v1382
    %1386 = vst [vmem:[#allocation13] sm:$0xff] %v1380
    // Predicated region
    $region38: #{tpu_custom_call.1} parent=1 // pred_check
      _
    $region39: #{tpu_custom_call.1} parent=1 // pred_check_branch
      %1388 = sbr.rel (0) target = $region41
    $region40: #{tpu_custom_call.1} parent=1 // pred_region
      %1390 = vsyncadd [#allocation4], 0
      %s1391 = sshll.u32 [#allocation10], 4
      %s1392 = int_to_ptr.vmem [resolvable:$true] %s1391
      %s1393 = sshll.u32 %s4, 4
      %s1394 = int_to_ptr.hbm [resolvable:$true] %s1393
      %1399 = dma.vmem_to_hbm [thread:$0]  %s1392, 1024, %s1394, [#allocation4], 128, 128, 8
    $region41: #{tpu_custom_call.1} parent=1 // pred_fallthru
      _
    // Predicated region
    $region42: #{tpu_custom_call.1} parent=1 // pred_check
      _
    $region43: #{tpu_custom_call.1} parent=1 // pred_check_branch
      %1401 = sbr.rel (0) target = $region45
    $region44: #{tpu_custom_call.1} parent=1 // pred_region
      %1403 = vsyncadd [#allocation12], 0
      %s1405 = sshll.u32 [#allocation11], 4
      %s1406 = int_to_ptr.vmem [resolvable:$true] %s1405
      %s1407 = sshll.u32 %s5, 4
      %s1408 = int_to_ptr.hbm [resolvable:$true] %s1407
      %1410 = dma.vmem_to_hbm [thread:$0]  %s1406, 128, %s1408, [#allocation12]
    $region45: #{tpu_custom_call.1} parent=1 // pred_fallthru
      _
    // Predicated region
    $region46: #{tpu_custom_call.1} parent=1 // pred_check
      _
    $region47: #{tpu_custom_call.1} parent=1 // pred_check_branch
      %1412 = sbr.rel (0) target = $region49
    $region48: #{tpu_custom_call.1} parent=1 // pred_region
      %1414 = vsyncadd [#allocation12], 0
      %s1416 = sshll.u32 [#allocation13], 4
      %s1417 = int_to_ptr.vmem [resolvable:$true] %s1416
      %s1418 = sshll.u32 %s6, 4
      %s1419 = int_to_ptr.hbm [resolvable:$true] %s1418
      %1421 = dma.vmem_to_hbm [thread:$0]  %s1417, 128, %s1419, [#allocation12]
    $region49: #{tpu_custom_call.1} parent=1 // pred_fallthru
      _
    // Predicated region
    $region50: #{tpu_custom_call.1} parent=1 // pred_check
      _
    $region51: #{tpu_custom_call.1} parent=1 // pred_check_branch
      %1423 = sbr.rel (0) target = $region53
    $region52: #{tpu_custom_call.1} parent=1 // pred_region
      %1425 = dma.done [#allocation4], 1024
    $region53: #{tpu_custom_call.1} parent=1 // pred_fallthru
      _
    // Predicated region
    $region54: #{tpu_custom_call.1} parent=1 // pred_check
      _
    $region55: #{tpu_custom_call.1} parent=1 // pred_check_branch
      %1427 = sbr.rel (0) target = $region57
    $region56: #{tpu_custom_call.1} parent=1 // pred_region
      %1429 = dma.done [#allocation12], 128
    $region57: #{tpu_custom_call.1} parent=1 // pred_fallthru
      _
    // Predicated region
    $region58: #{tpu_custom_call.1} parent=1 // pred_check
      _
    $region59: #{tpu_custom_call.1} parent=1 // pred_check_branch
      %1431 = sbr.rel (0) target = $region61
    $region60: #{tpu_custom_call.1} parent=1 // pred_region
      %1433 = dma.done [#allocation12], 128
    $region61: #{tpu_custom_call.1} parent=1 // pred_fallthru
      _
    %1434 = vsyncpa [#allocation3], 1
    %1435 = vsyncpa [#allocation6], 1
    %1436 = vsyncpa [#allocation9], 1
    %1437 = vsyncpa [#allocation4], 1
    %1438 = vsyncpa [#allocation12], 1

</llo_original>
